<compile_context>
chip_gen: v6e
topology: v6e:2x2x1
jax: 0.10.0
libtpu: 0.0.40
codegen_flags: <defaults>
</compile_context>

<pallas_src>
import math

import jax
import jax.numpy as jnp
import numpy as np
from jax.experimental import pallas as pl
from jax.experimental.pallas import tpu as pltpu

EPS = 1e-5
MATMUL_DTYPE = jnp.bfloat16      # MXU operand dtype (accumulation is f32)


def _gelu_exact(x):
    # PyTorch nn.GELU() default (exact, erf-based).
    return 0.5 * x * (1.0 + jax.lax.erf(x * (1.0 / math.sqrt(2.0))))


# --------------------------- Residual_Convs kernel ---------------------------
def _make_res_convs_kernel(H, W, Cin, Cout, residual, add_embed):
    HW = H * W
    inv_n = 1.0 / float(Cout * HW)

    def groupnorm(y, gamma, beta):
        # GroupNorm(1, C): stats over the whole (C, H*W) sample, single pass.
        # (|mean| << std for these activations, so E[x^2]-mean^2 is safe in f32.)
        mean = jnp.sum(y) * inv_n
        var = jnp.sum(y * y) * inv_n - mean * mean
        inv = jax.lax.rsqrt(var + EPS)
        return (y - mean) * inv * gamma + beta          # gamma/beta: (C,1) lane-broadcast

    def conv3x3(s, w2d, bias):
        # s:   (Ci, H*W) f32, row-major (H, W) flattened onto the lane axis.
        # w2d: (Cout, 9*Ci) bf16, rows ordered (dy*3 + dx)*Ci + c.
        # Returns (Cout, H*W) f32 == 3x3 conv with 1-pixel reflect padding.
        ci = s.shape[0]
        # Reflect pad in H: rows are contiguous W-wide chunks of the lane axis,
        # so the halo rows are just two lane slices concatenated on (cheap).
        sp = jnp.concatenate(
            [s[:, W:2 * W], s, s[:, (H - 2) * W:(H - 1) * W]], axis=1)   # (ci,(H+2)*W)

        col = jax.lax.broadcasted_iota(jnp.int32, (ci, HW), 1) % W
        first_col = col == 0
        last_col = col == W - 1

        taps = []
        for dy in range(3):
            b = sp[:, dy * W:dy * W + HW]                # rows (y + dy - 1), reflected
            # shift-by-one along the flat lane axis; the row-wrap / filler
            # elements only appear where the reflect select overrides them.
            left = jnp.concatenate([b[:, :1], b[:, :-1]], axis=1)    # value at x-1
            right = jnp.concatenate([b[:, 1:], b[:, -1:]], axis=1)   # value at x+1
            taps.append(jnp.where(first_col, right, left))   # dx=0 -> reflect(x-1)
            taps.append(b)                                    # dx=1 -> x
            taps.append(jnp.where(last_col, left, right))     # dx=2 -> reflect(x+1)

        slab = jnp.concatenate(taps, axis=0).astype(MATMUL_DTYPE)     # (9*ci, HW)
        acc = jnp.dot(w2d, slab, preferred_element_type=jnp.float32)  # (Cout, HW)
        return acc + bias

    def kernel(*refs):
        if add_embed:
            x_ref, w1_ref, w2_ref, p_ref, emb_ref, out_ref = refs
        else:
            x_ref, w1_ref, w2_ref, p_ref, out_ref = refs

        x = x_ref[0]                                           # (Cin, HW) f32

        h = conv3x3(x, w1_ref[...], p_ref[0])                  # conv1 + bias
        h = _gelu_exact(groupnorm(h, p_ref[1], p_ref[2]))      # GN1 + GELU

        h2 = conv3x3(h, w2_ref[...], p_ref[3])                 # conv2 + bias
        h2 = groupnorm(h2, p_ref[4], p_ref[5])                 # GN2

        if residual:
            h2 = h2 + x            # Cin == Cout on the residual path (lane-dense add)
        h2 = _gelu_exact(h2)
        if add_embed:
            h2 = h2 + emb_ref[0]                               # (Cout,1) lane-broadcast
        out_ref[0] = h2

    return kernel


def residual_convs_pallas(x_nchw, params, *, residual, t_emb=None):
    """Residual_Convs forward.  x_nchw: (N, Cin, H, W) f32.
    params = (w1, b1, g1, be1, w2, b2, g2, be2) with PyTorch layouts
    (conv weights OIHW).  If t_emb (N, Cout) is given, it is broadcast-added
    to the output inside the kernel epilogue (Downsample's embedding add)."""
    w1, b1, g1, be1, w2, b2, g2, be2 = params
    N, Cin, H, W = x_nchw.shape
    Cout = w1.shape[0]
    HW = H * W
    assert H >= 2 and W >= 2, "reflect padding (pad=1) needs H, W >= 2"
    if residual:
        assert Cin == Cout, "residual path requires in_channels == out_channels"
    assert w1.shape == (Cout, Cin, 3, 3) and w2.shape == (Cout, Cout, 3, 3)

    # Lane-dense layout: spatial on lanes, channels on sublanes.  NCHW <->
    # (N, C, H*W) is a free contiguous reshape on the XLA side (no transpose).
    x_flat = x_nchw.reshape(N, Cin, HW).astype(jnp.float32)

    # Reorder 3x3 weights to match the in-kernel im2col slab: row (dy*3+dx)*Ci + c.
    w1_2d = jnp.transpose(w1, (0, 2, 3, 1)).reshape(Cout, 9 * Cin).astype(MATMUL_DTYPE)
    w2_2d = jnp.transpose(w2, (0, 2, 3, 1)).reshape(Cout, 9 * Cout).astype(MATMUL_DTYPE)

    # Pack the six per-channel vectors into a single small input (one DMA).
    pack = jnp.stack([b1, g1, be1, b2, g2, be2]).astype(jnp.float32).reshape(6, Cout, 1)

    add_embed = t_emb is not None
    kernel = _make_res_convs_kernel(H, W, Cin, Cout, residual, add_embed)

    in_specs = [
        pl.BlockSpec((1, Cin, HW), lambda n: (n, 0, 0)),
        pl.BlockSpec((Cout, 9 * Cin), lambda n: (0, 0)),
        pl.BlockSpec((Cout, 9 * Cout), lambda n: (0, 0)),
        pl.BlockSpec((6, Cout, 1), lambda n: (0, 0, 0)),
    ]
    inputs = [x_flat, w1_2d, w2_2d, pack]
    if add_embed:
        in_specs.append(pl.BlockSpec((1, Cout, 1), lambda n: (n, 0, 0)))
        inputs.append(t_emb.reshape(N, Cout, 1).astype(jnp.float32))

    flops = 2 * N * HW * 9 * (Cin * Cout + Cout * Cout)
    bytes_accessed = 4 * (x_flat.size + N * Cout * HW + pack.size) \
        + 2 * (w1_2d.size + w2_2d.size)
    cost = pl.CostEstimate(flops=int(flops),
                           transcendentals=int(2 * N * HW * Cout),
                           bytes_accessed=int(bytes_accessed))

    # VMEM budget: double-buffered in/out blocks + weights + im2col temporaries.
    bytes_per_step = 4 * (Cin + Cout) * HW + 2 * (w1_2d.size + w2_2d.size) + 4 * pack.size
    vmem_limit = int(min(110 * 2**20, max(32 * 2**20, 16 * bytes_per_step)))
    # TODO(synk): for large H*W add a row-tiled grid axis + two-pass GroupNorm
    # (stats kernel, then normalize) so one sample's working set fits v7x's 64 MiB VMEM.

    out_flat = pl.pallas_call(
        kernel,
        out_shape=jax.ShapeDtypeStruct((N, Cout, HW), jnp.float32),
        grid=(N,),
        in_specs=in_specs,
        out_specs=pl.BlockSpec((1, Cout, HW), lambda n: (n, 0, 0)),
        compiler_params=pltpu.CompilerParams(
            dimension_semantics=("parallel",),      # batch elements independent
            vmem_limit_bytes=vmem_limit),
        cost_estimate=cost,
    )(*inputs)

    return out_flat.reshape(N, Cout, H, W)          # free reshape back to NCHW


# ---------------------------- time embedding ---------------------------------
def time_embed_pallas(t, w_lin, b_lin):
    """nn.SiLU() -> nn.Linear(embed_dim, C_out).  w_lin: (C_out, E) PyTorch layout."""
    N, E = t.shape
    Cout = w_lin.shape[0]

    def kernel(t_ref, w_ref, b_ref, o_ref):
        s = t_ref[...]
        s = s * jax.nn.sigmoid(s)                               # SiLU
        o_ref[...] = jnp.dot(s, w_ref[...],
                             preferred_element_type=jnp.float32) + b_ref[...]

    return pl.pallas_call(
        kernel,
        out_shape=jax.ShapeDtypeStruct((N, Cout), jnp.float32),
    )(t.astype(jnp.float32), jnp.transpose(w_lin).astype(jnp.float32),
      b_lin.reshape(1, Cout).astype(jnp.float32))


# ------------------------------- Downsample ----------------------------------
def downsample_pallas(data, t, params):
    N, Cin, H0, W0 = data.shape
    assert H0 % 2 == 0 and W0 % 2 == 0 and H0 >= 4 and W0 >= 4
    # nn.MaxPool2d(2, 2): trivial memory-bound reshuffle, left to XLA glue.
    x = data.reshape(N, Cin, H0 // 2, 2, W0 // 2, 2).max(axis=(3, 5))
    # Residual_Convs(Cin, Cin, residual=True)
    x = residual_convs_pallas(x, params["rc1"], residual=True)
    # SiLU -> Linear(embed_dim, Cout); its spatial broadcast-add is fused into
    # the epilogue of the second Residual_Convs kernel.
    t_emb = time_embed_pallas(t, params["emb_w"], params["emb_b"])
    # Residual_Convs(Cin, Cout) (+ fused embedding add)
    return residual_convs_pallas(x, params["rc2"], residual=False, t_emb=t_emb)


# --------------- pure-JAX reference (verification only) ----------------------
# Mirrors the kernel's mixed precision: conv operands cast to MATMUL_DTYPE,
# f32 accumulation; everything else f32 (this matches PyTorch's math structure,
# deviating from exact-f32 only at the bf16 MXU-operand level).
def _ref_res_convs(x, p, residual, matmul_dtype):
    w1, b1, g1, be1, w2, b2, g2, be2 = p

    def conv(h, w, b):
        hp = jnp.pad(h, ((0, 0), (0, 0), (1, 1), (1, 1)), mode="reflect")
        y = jax.lax.conv_general_dilated(
            hp.astype(matmul_dtype), w.astype(matmul_dtype),
            window_strides=(1, 1), padding="VALID",
            dimension_numbers=("NCHW", "OIHW", "NCHW"),
            preferred_element_type=jnp.float32)
        return y + b.reshape(1, -1, 1, 1)

    def gn(h, g, bb):
        m = jnp.mean(h, axis=(1, 2, 3), keepdims=True)
        v = jnp.mean((h - m) ** 2, axis=(1, 2, 3), keepdims=True)
        return (h - m) * jax.lax.rsqrt(v + EPS) * g.reshape(1, -1, 1, 1) \
            + bb.reshape(1, -1, 1, 1)

    h = _gelu_exact(gn(conv(x, w1, b1), g1, be1))
    h = gn(conv(h, w2, b2), g2, be2)
    if residual:
        h = h + x
    return _gelu_exact(h)


def _ref_downsample(data, t, params, matmul_dtype):
    N, Cin, H0, W0 = data.shape
    x = data.reshape(N, Cin, H0 // 2, 2, W0 // 2, 2).max(axis=(3, 5))
    x = _ref_res_convs(x, params["rc1"], True, matmul_dtype)
    x = _ref_res_convs(x, params["rc2"], False, matmul_dtype)
    s = t * jax.nn.sigmoid(t)
    emb = s @ jnp.transpose(params["emb_w"]) + params["emb_b"]
    return x + emb[:, :, None, None]


if __name__ == "__main__":
    # Small shapes consistent with Downsample.forward(data, t).
    N, Cin, Cout, H0, W0, E = 2, 4, 8, 16, 16, 32

    key = jax.random.PRNGKey(0)
    keys = iter(jax.random.split(key, 24))
    nrm = lambda shape, scale=1.0: scale * jax.random.normal(next(keys), shape, jnp.float32)

    data = nrm((N, Cin, H0, W0))
    t = nrm((N, E))

    def make_rc(ci, co):
        return (
            nrm((co, ci, 3, 3), 0.2),   # conv1 weight (OIHW)
            nrm((co,), 0.1),            # conv1 bias
            1.0 + nrm((co,), 0.1),      # GN1 gamma
            nrm((co,), 0.1),            # GN1 beta
            nrm((co, co, 3, 3), 0.2),   # conv2 weight
            nrm((co,), 0.1),            # conv2 bias
            1.0 + nrm((co,), 0.1),      # GN2 gamma
            nrm((co,), 0.1),            # GN2 beta
        )

    params = {
        "rc1": make_rc(Cin, Cin),       # Residual_Convs(Cin, Cin, residual=True)
        "rc2": make_rc(Cin, Cout),      # Residual_Convs(Cin, Cout)
        "emb_w": nrm((Cout, E), 0.2),   # Linear(E, Cout) weight (PyTorch layout)
        "emb_b": nrm((Cout,), 0.1),
    }

    out = jax.block_until_ready(jax.jit(downsample_pallas)(data, t, params))
    ref = jax.block_until_ready(_ref_downsample(data, t, params, MATMUL_DTYPE))
    np.testing.assert_allclose(np.asarray(out), np.asarray(ref),
                               rtol=3e-4, atol=3e-4)

    print("KERNEL_OK")
</pallas_src>

<mosaic_0001>
module attributes {stable_mosaic.version = 11 : i64} {
  func.func @kernel(%arg0: i32, %arg1: memref<1x4x64xf32, #tpu.memory_space<vmem>>, %arg2: memref<4x36xbf16, #tpu.memory_space<vmem>>, %arg3: memref<4x36xbf16, #tpu.memory_space<vmem>>, %arg4: memref<6x4x1xf32, #tpu.memory_space<vmem>>, %arg5: memref<1x4x64xf32, #tpu.memory_space<vmem>>) attributes {dimension_semantics = [#tpu.dimension_semantics<parallel>], iteration_bounds = array<i64: 2>, scalar_prefetch = 0 : i64, scratch_operands = 0 : i64, tpu.core_type = #tpu.core_type<tc>, window_params = [{transform_indices = @transform_0, window_bounds = array<i64: 1, 4, 64>}, {pipeline_mode = #tpu.pipeline_mode<synchronous>, transform_indices = @transform_1, window_bounds = array<i64: 4, 36>}, {pipeline_mode = #tpu.pipeline_mode<synchronous>, transform_indices = @transform_2, window_bounds = array<i64: 4, 36>}, {pipeline_mode = #tpu.pipeline_mode<synchronous>, transform_indices = @transform_3, window_bounds = array<i64: 6, 4, 1>}, {transform_indices = @transform_4, window_bounds = array<i64: 1, 4, 64>}]} {
    %c0 = arith.constant 0 : index
    %c0_0 = arith.constant 0 : index
    %c0_1 = arith.constant 0 : index
    %0 = vector.load %arg1[%c0, %c0_0, %c0_1] : memref<1x4x64xf32, #tpu.memory_space<vmem>>, vector<1x4x64xf32>
    %1 = vector.shape_cast %0 : vector<1x4x64xf32> to vector<4x64xf32>
    %c0_2 = arith.constant 0 : index
    %c0_3 = arith.constant 0 : index
    %2 = vector.load %arg2[%c0_2, %c0_3] : memref<4x36xbf16, #tpu.memory_space<vmem>>, vector<4x36xbf16>
    %c0_4 = arith.constant 0 : index
    %c0_5 = arith.constant 0 : index
    %c0_6 = arith.constant 0 : index
    %3 = vector.load %arg4[%c0_4, %c0_5, %c0_6] : memref<6x4x1xf32, #tpu.memory_space<vmem>>, vector<1x4x1xf32>
    %4 = vector.shape_cast %3 : vector<1x4x1xf32> to vector<4x1xf32>
    %5 = vector.extract_strided_slice %1 {offsets = [0, 8], sizes = [4, 8], strides = [1, 1]} : vector<4x64xf32> to vector<4x8xf32>
    %6 = vector.extract_strided_slice %1 {offsets = [0, 48], sizes = [4, 8], strides = [1, 1]} : vector<4x64xf32> to vector<4x8xf32>
    %7 = tpu.concatenate %5, %1, %6 in 1 : vector<4x8xf32>, vector<4x64xf32>, vector<4x8xf32> -> vector<4x80xf32>
    %8 = tpu.iota {dimensions = array<i32: 1>} : vector<4x64xi32>
    %c8_i32 = arith.constant 8 : i32
    %c0_i32 = arith.constant 0 : i32
    %9 = arith.cmpi eq, %c8_i32, %c0_i32 : i32
    %c1_i32 = arith.constant 1 : i32
    %10 = arith.select %9, %c1_i32, %c8_i32 : i32
    %11 = vector.broadcast %10 : i32 to vector<4x64xi32>
    %12 = arith.remsi %8, %11 : vector<4x64xi32>
    %c0_i32_7 = arith.constant 0 : i32
    %13 = vector.broadcast %c0_i32_7 : i32 to vector<4x64xi32>
    %14 = arith.cmpi ne, %12, %13 : vector<4x64xi32>
    %c0_i32_8 = arith.constant 0 : i32
    %15 = vector.broadcast %c0_i32_8 : i32 to vector<4x64xi32>
    %16 = arith.cmpi slt, %12, %15 : vector<4x64xi32>
    %c0_i32_9 = arith.constant 0 : i32
    %17 = arith.cmpi slt, %10, %c0_i32_9 : i32
    %18 = vector.broadcast %17 : i1 to vector<4x64xi1>
    %19 = vector.broadcast %18 : vector<4x64xi1> to vector<4x64xi1>
    %20 = arith.xori %16, %19 : vector<4x64xi1>
    %21 = arith.andi %20, %14 : vector<4x64xi1>
    %22 = vector.broadcast %10 : i32 to vector<4x64xi32>
    %23 = arith.addi %12, %22 : vector<4x64xi32>
    %24 = arith.select %21, %23, %12 : vector<4x64xi1>, vector<4x64xi32>
    %c0_i32_10 = arith.constant 0 : i32
    %25 = vector.broadcast %c0_i32_10 : i32 to vector<4x64xi32>
    %26 = arith.cmpi eq, %24, %25 : vector<4x64xi32>
    %c7_i32 = arith.constant 7 : i32
    %27 = vector.broadcast %c7_i32 : i32 to vector<4x64xi32>
    %28 = arith.cmpi eq, %24, %27 : vector<4x64xi32>
    %29 = vector.extract_strided_slice %7 {offsets = [0, 0], sizes = [4, 64], strides = [1, 1]} : vector<4x80xf32> to vector<4x64xf32>
    %30 = vector.extract_strided_slice %29 {offsets = [0, 0], sizes = [4, 1], strides = [1, 1]} : vector<4x64xf32> to vector<4x1xf32>
    %31 = vector.extract_strided_slice %29 {offsets = [0, 0], sizes = [4, 63], strides = [1, 1]} : vector<4x64xf32> to vector<4x63xf32>
    %32 = tpu.concatenate %30, %31 in 1 : vector<4x1xf32>, vector<4x63xf32> -> vector<4x64xf32>
    %33 = vector.extract_strided_slice %29 {offsets = [0, 1], sizes = [4, 63], strides = [1, 1]} : vector<4x64xf32> to vector<4x63xf32>
    %34 = vector.extract_strided_slice %29 {offsets = [0, 63], sizes = [4, 1], strides = [1, 1]} : vector<4x64xf32> to vector<4x1xf32>
    %35 = tpu.concatenate %33, %34 in 1 : vector<4x63xf32>, vector<4x1xf32> -> vector<4x64xf32>
    %36 = arith.select %26, %35, %32 : vector<4x64xi1>, vector<4x64xf32>
    %37 = arith.select %28, %32, %35 : vector<4x64xi1>, vector<4x64xf32>
    %38 = vector.extract_strided_slice %7 {offsets = [0, 8], sizes = [4, 64], strides = [1, 1]} : vector<4x80xf32> to vector<4x64xf32>
    %39 = vector.extract_strided_slice %38 {offsets = [0, 0], sizes = [4, 1], strides = [1, 1]} : vector<4x64xf32> to vector<4x1xf32>
    %40 = vector.extract_strided_slice %38 {offsets = [0, 0], sizes = [4, 63], strides = [1, 1]} : vector<4x64xf32> to vector<4x63xf32>
    %41 = tpu.concatenate %39, %40 in 1 : vector<4x1xf32>, vector<4x63xf32> -> vector<4x64xf32>
    %42 = vector.extract_strided_slice %38 {offsets = [0, 1], sizes = [4, 63], strides = [1, 1]} : vector<4x64xf32> to vector<4x63xf32>
    %43 = vector.extract_strided_slice %38 {offsets = [0, 63], sizes = [4, 1], strides = [1, 1]} : vector<4x64xf32> to vector<4x1xf32>
    %44 = tpu.concatenate %42, %43 in 1 : vector<4x63xf32>, vector<4x1xf32> -> vector<4x64xf32>
    %45 = arith.select %26, %44, %41 : vector<4x64xi1>, vector<4x64xf32>
    %46 = arith.select %28, %41, %44 : vector<4x64xi1>, vector<4x64xf32>
    %47 = vector.extract_strided_slice %7 {offsets = [0, 16], sizes = [4, 64], strides = [1, 1]} : vector<4x80xf32> to vector<4x64xf32>
    %48 = vector.extract_strided_slice %47 {offsets = [0, 0], sizes = [4, 1], strides = [1, 1]} : vector<4x64xf32> to vector<4x1xf32>
    %49 = vector.extract_strided_slice %47 {offsets = [0, 0], sizes = [4, 63], strides = [1, 1]} : vector<4x64xf32> to vector<4x63xf32>
    %50 = tpu.concatenate %48, %49 in 1 : vector<4x1xf32>, vector<4x63xf32> -> vector<4x64xf32>
    %51 = vector.extract_strided_slice %47 {offsets = [0, 1], sizes = [4, 63], strides = [1, 1]} : vector<4x64xf32> to vector<4x63xf32>
    %52 = vector.extract_strided_slice %47 {offsets = [0, 63], sizes = [4, 1], strides = [1, 1]} : vector<4x64xf32> to vector<4x1xf32>
    %53 = tpu.concatenate %51, %52 in 1 : vector<4x63xf32>, vector<4x1xf32> -> vector<4x64xf32>
    %54 = arith.select %26, %53, %50 : vector<4x64xi1>, vector<4x64xf32>
    %55 = arith.select %28, %50, %53 : vector<4x64xi1>, vector<4x64xf32>
    %56 = tpu.concatenate %36, %29, %37, %45, %38, %46, %54, %47, %55 in 0 : vector<4x64xf32>, vector<4x64xf32>, vector<4x64xf32>, vector<4x64xf32>, vector<4x64xf32>, vector<4x64xf32>, vector<4x64xf32>, vector<4x64xf32>, vector<4x64xf32> -> vector<36x64xf32>
    %57 = arith.truncf %56 : vector<36x64xf32> to vector<36x64xbf16>
    %cst = arith.constant dense<0.000000e+00> : vector<4x64xf32>
    %58 = tpu.matmul %2, %57, %cst {dimension_numbers = #tpu.dot_dimension_numbers<[1], [0], [0], [1], [0, 0, 1, 1], [], []>} : vector<4x36xbf16>, vector<36x64xbf16>, vector<4x64xf32> -> vector<4x64xf32>
    %59 = vector.broadcast %4 : vector<4x1xf32> to vector<4x64xf32>
    %60 = arith.addf %58, %59 : vector<4x64xf32>
    %c1 = arith.constant 1 : index
    %c0_11 = arith.constant 0 : index
    %c0_12 = arith.constant 0 : index
    %61 = vector.load %arg4[%c1, %c0_11, %c0_12] : memref<6x4x1xf32, #tpu.memory_space<vmem>>, vector<1x4x1xf32>
    %62 = vector.shape_cast %61 : vector<1x4x1xf32> to vector<4x1xf32>
    %c2 = arith.constant 2 : index
    %c0_13 = arith.constant 0 : index
    %c0_14 = arith.constant 0 : index
    %63 = vector.load %arg4[%c2, %c0_13, %c0_14] : memref<6x4x1xf32, #tpu.memory_space<vmem>>, vector<1x4x1xf32>
    %64 = vector.shape_cast %63 : vector<1x4x1xf32> to vector<4x1xf32>
    %65 = vector.shape_cast %60 : vector<4x64xf32> to vector<1x4x64xf32>
    %cst_15 = arith.constant dense<0.000000e+00> : vector<1xf32>
    %66 = vector.multi_reduction <add>, %65, %cst_15 [1, 2] : vector<1x4x64xf32> to vector<1xf32>
    %67 = vector.shape_cast %66 : vector<1xf32> to vector<1x1x1xf32>
    %68 = vector.extract %67[0, 0, 0] : f32 from vector<1x1x1xf32>
    %cst_16 = arith.constant 3.906250e-03 : f32
    %69 = arith.mulf %68, %cst_16 : f32
    %70 = arith.mulf %60, %60 : vector<4x64xf32>
    %71 = vector.shape_cast %70 : vector<4x64xf32> to vector<1x4x64xf32>
    %cst_17 = arith.constant dense<0.000000e+00> : vector<1xf32>
    %72 = vector.multi_reduction <add>, %71, %cst_17 [1, 2] : vector<1x4x64xf32> to vector<1xf32>
    %73 = vector.shape_cast %72 : vector<1xf32> to vector<1x1x1xf32>
    %74 = vector.extract %73[0, 0, 0] : f32 from vector<1x1x1xf32>
    %cst_18 = arith.constant 3.906250e-03 : f32
    %75 = arith.mulf %74, %cst_18 : f32
    %76 = arith.mulf %69, %69 : f32
    %77 = arith.subf %75, %76 : f32
    %cst_19 = arith.constant 9.99999974E-6 : f32
    %78 = arith.addf %77, %cst_19 : f32
    %79 = math.rsqrt %78 : f32
    %80 = vector.broadcast %69 : f32 to vector<4x64xf32>
    %81 = arith.subf %60, %80 : vector<4x64xf32>
    %82 = vector.broadcast %79 : f32 to vector<4x64xf32>
    %83 = arith.mulf %81, %82 : vector<4x64xf32>
    %84 = vector.broadcast %62 : vector<4x1xf32> to vector<4x64xf32>
    %85 = arith.mulf %83, %84 : vector<4x64xf32>
    %86 = vector.broadcast %64 : vector<4x1xf32> to vector<4x64xf32>
    %87 = arith.addf %85, %86 : vector<4x64xf32>
    %cst_20 = arith.constant 5.000000e-01 : f32
    %88 = vector.broadcast %cst_20 : f32 to vector<4x64xf32>
    %89 = arith.mulf %88, %87 : vector<4x64xf32>
    %cst_21 = arith.constant 0.707106769 : f32
    %90 = vector.broadcast %cst_21 : f32 to vector<4x64xf32>
    %91 = arith.mulf %87, %90 : vector<4x64xf32>
    %92 = math.erf %91 : vector<4x64xf32>
    %cst_22 = arith.constant 1.000000e+00 : f32
    %93 = vector.broadcast %cst_22 : f32 to vector<4x64xf32>
    %94 = arith.addf %93, %92 : vector<4x64xf32>
    %95 = arith.mulf %89, %94 : vector<4x64xf32>
    %c0_23 = arith.constant 0 : index
    %c0_24 = arith.constant 0 : index
    %96 = vector.load %arg3[%c0_23, %c0_24] : memref<4x36xbf16, #tpu.memory_space<vmem>>, vector<4x36xbf16>
    %c3 = arith.constant 3 : index
    %c0_25 = arith.constant 0 : index
    %c0_26 = arith.constant 0 : index
    %97 = vector.load %arg4[%c3, %c0_25, %c0_26] : memref<6x4x1xf32, #tpu.memory_space<vmem>>, vector<1x4x1xf32>
    %98 = vector.shape_cast %97 : vector<1x4x1xf32> to vector<4x1xf32>
    %99 = vector.extract_strided_slice %95 {offsets = [0, 8], sizes = [4, 8], strides = [1, 1]} : vector<4x64xf32> to vector<4x8xf32>
    %100 = vector.extract_strided_slice %95 {offsets = [0, 48], sizes = [4, 8], strides = [1, 1]} : vector<4x64xf32> to vector<4x8xf32>
    %101 = tpu.concatenate %99, %95, %100 in 1 : vector<4x8xf32>, vector<4x64xf32>, vector<4x8xf32> -> vector<4x80xf32>
    %102 = tpu.iota {dimensions = array<i32: 1>} : vector<4x64xi32>
    %c8_i32_27 = arith.constant 8 : i32
    %c0_i32_28 = arith.constant 0 : i32
    %103 = arith.cmpi eq, %c8_i32_27, %c0_i32_28 : i32
    %c1_i32_29 = arith.constant 1 : i32
    %104 = arith.select %103, %c1_i32_29, %c8_i32_27 : i32
    %105 = vector.broadcast %104 : i32 to vector<4x64xi32>
    %106 = arith.remsi %102, %105 : vector<4x64xi32>
    %c0_i32_30 = arith.constant 0 : i32
    %107 = vector.broadcast %c0_i32_30 : i32 to vector<4x64xi32>
    %108 = arith.cmpi ne, %106, %107 : vector<4x64xi32>
    %c0_i32_31 = arith.constant 0 : i32
    %109 = vector.broadcast %c0_i32_31 : i32 to vector<4x64xi32>
    %110 = arith.cmpi slt, %106, %109 : vector<4x64xi32>
    %c0_i32_32 = arith.constant 0 : i32
    %111 = arith.cmpi slt, %104, %c0_i32_32 : i32
    %112 = vector.broadcast %111 : i1 to vector<4x64xi1>
    %113 = vector.broadcast %112 : vector<4x64xi1> to vector<4x64xi1>
    %114 = arith.xori %110, %113 : vector<4x64xi1>
    %115 = arith.andi %114, %108 : vector<4x64xi1>
    %116 = vector.broadcast %104 : i32 to vector<4x64xi32>
    %117 = arith.addi %106, %116 : vector<4x64xi32>
    %118 = arith.select %115, %117, %106 : vector<4x64xi1>, vector<4x64xi32>
    %c0_i32_33 = arith.constant 0 : i32
    %119 = vector.broadcast %c0_i32_33 : i32 to vector<4x64xi32>
    %120 = arith.cmpi eq, %118, %119 : vector<4x64xi32>
    %c7_i32_34 = arith.constant 7 : i32
    %121 = vector.broadcast %c7_i32_34 : i32 to vector<4x64xi32>
    %122 = arith.cmpi eq, %118, %121 : vector<4x64xi32>
    %123 = vector.extract_strided_slice %101 {offsets = [0, 0], sizes = [4, 64], strides = [1, 1]} : vector<4x80xf32> to vector<4x64xf32>
    %124 = vector.extract_strided_slice %123 {offsets = [0, 0], sizes = [4, 1], strides = [1, 1]} : vector<4x64xf32> to vector<4x1xf32>
    %125 = vector.extract_strided_slice %123 {offsets = [0, 0], sizes = [4, 63], strides = [1, 1]} : vector<4x64xf32> to vector<4x63xf32>
    %126 = tpu.concatenate %124, %125 in 1 : vector<4x1xf32>, vector<4x63xf32> -> vector<4x64xf32>
    %127 = vector.extract_strided_slice %123 {offsets = [0, 1], sizes = [4, 63], strides = [1, 1]} : vector<4x64xf32> to vector<4x63xf32>
    %128 = vector.extract_strided_slice %123 {offsets = [0, 63], sizes = [4, 1], strides = [1, 1]} : vector<4x64xf32> to vector<4x1xf32>
    %129 = tpu.concatenate %127, %128 in 1 : vector<4x63xf32>, vector<4x1xf32> -> vector<4x64xf32>
    %130 = arith.select %120, %129, %126 : vector<4x64xi1>, vector<4x64xf32>
    %131 = arith.select %122, %126, %129 : vector<4x64xi1>, vector<4x64xf32>
    %132 = vector.extract_strided_slice %101 {offsets = [0, 8], sizes = [4, 64], strides = [1, 1]} : vector<4x80xf32> to vector<4x64xf32>
    %133 = vector.extract_strided_slice %132 {offsets = [0, 0], sizes = [4, 1], strides = [1, 1]} : vector<4x64xf32> to vector<4x1xf32>
    %134 = vector.extract_strided_slice %132 {offsets = [0, 0], sizes = [4, 63], strides = [1, 1]} : vector<4x64xf32> to vector<4x63xf32>
    %135 = tpu.concatenate %133, %134 in 1 : vector<4x1xf32>, vector<4x63xf32> -> vector<4x64xf32>
    %136 = vector.extract_strided_slice %132 {offsets = [0, 1], sizes = [4, 63], strides = [1, 1]} : vector<4x64xf32> to vector<4x63xf32>
    %137 = vector.extract_strided_slice %132 {offsets = [0, 63], sizes = [4, 1], strides = [1, 1]} : vector<4x64xf32> to vector<4x1xf32>
    %138 = tpu.concatenate %136, %137 in 1 : vector<4x63xf32>, vector<4x1xf32> -> vector<4x64xf32>
    %139 = arith.select %120, %138, %135 : vector<4x64xi1>, vector<4x64xf32>
    %140 = arith.select %122, %135, %138 : vector<4x64xi1>, vector<4x64xf32>
    %141 = vector.extract_strided_slice %101 {offsets = [0, 16], sizes = [4, 64], strides = [1, 1]} : vector<4x80xf32> to vector<4x64xf32>
    %142 = vector.extract_strided_slice %141 {offsets = [0, 0], sizes = [4, 1], strides = [1, 1]} : vector<4x64xf32> to vector<4x1xf32>
    %143 = vector.extract_strided_slice %141 {offsets = [0, 0], sizes = [4, 63], strides = [1, 1]} : vector<4x64xf32> to vector<4x63xf32>
    %144 = tpu.concatenate %142, %143 in 1 : vector<4x1xf32>, vector<4x63xf32> -> vector<4x64xf32>
    %145 = vector.extract_strided_slice %141 {offsets = [0, 1], sizes = [4, 63], strides = [1, 1]} : vector<4x64xf32> to vector<4x63xf32>
    %146 = vector.extract_strided_slice %141 {offsets = [0, 63], sizes = [4, 1], strides = [1, 1]} : vector<4x64xf32> to vector<4x1xf32>
    %147 = tpu.concatenate %145, %146 in 1 : vector<4x63xf32>, vector<4x1xf32> -> vector<4x64xf32>
    %148 = arith.select %120, %147, %144 : vector<4x64xi1>, vector<4x64xf32>
    %149 = arith.select %122, %144, %147 : vector<4x64xi1>, vector<4x64xf32>
    %150 = tpu.concatenate %130, %123, %131, %139, %132, %140, %148, %141, %149 in 0 : vector<4x64xf32>, vector<4x64xf32>, vector<4x64xf32>, vector<4x64xf32>, vector<4x64xf32>, vector<4x64xf32>, vector<4x64xf32>, vector<4x64xf32>, vector<4x64xf32> -> vector<36x64xf32>
    %151 = arith.truncf %150 : vector<36x64xf32> to vector<36x64xbf16>
    %cst_35 = arith.constant dense<0.000000e+00> : vector<4x64xf32>
    %152 = tpu.matmul %96, %151, %cst_35 {dimension_numbers = #tpu.dot_dimension_numbers<[1], [0], [0], [1], [0, 0, 1, 1], [], []>} : vector<4x36xbf16>, vector<36x64xbf16>, vector<4x64xf32> -> vector<4x64xf32>
    %153 = vector.broadcast %98 : vector<4x1xf32> to vector<4x64xf32>
    %154 = arith.addf %152, %153 : vector<4x64xf32>
    %c4 = arith.constant 4 : index
    %c0_36 = arith.constant 0 : index
    %c0_37 = arith.constant 0 : index
    %155 = vector.load %arg4[%c4, %c0_36, %c0_37] : memref<6x4x1xf32, #tpu.memory_space<vmem>>, vector<1x4x1xf32>
    %156 = vector.shape_cast %155 : vector<1x4x1xf32> to vector<4x1xf32>
    %c5 = arith.constant 5 : index
    %c0_38 = arith.constant 0 : index
    %c0_39 = arith.constant 0 : index
    %157 = vector.load %arg4[%c5, %c0_38, %c0_39] : memref<6x4x1xf32, #tpu.memory_space<vmem>>, vector<1x4x1xf32>
    %158 = vector.shape_cast %157 : vector<1x4x1xf32> to vector<4x1xf32>
    %159 = vector.shape_cast %154 : vector<4x64xf32> to vector<1x4x64xf32>
    %cst_40 = arith.constant dense<0.000000e+00> : vector<1xf32>
    %160 = vector.multi_reduction <add>, %159, %cst_40 [1, 2] : vector<1x4x64xf32> to vector<1xf32>
    %161 = vector.shape_cast %160 : vector<1xf32> to vector<1x1x1xf32>
    %162 = vector.extract %161[0, 0, 0] : f32 from vector<1x1x1xf32>
    %cst_41 = arith.constant 3.906250e-03 : f32
    %163 = arith.mulf %162, %cst_41 : f32
    %164 = arith.mulf %154, %154 : vector<4x64xf32>
    %165 = vector.shape_cast %164 : vector<4x64xf32> to vector<1x4x64xf32>
    %cst_42 = arith.constant dense<0.000000e+00> : vector<1xf32>
    %166 = vector.multi_reduction <add>, %165, %cst_42 [1, 2] : vector<1x4x64xf32> to vector<1xf32>
    %167 = vector.shape_cast %166 : vector<1xf32> to vector<1x1x1xf32>
    %168 = vector.extract %167[0, 0, 0] : f32 from vector<1x1x1xf32>
    %cst_43 = arith.constant 3.906250e-03 : f32
    %169 = arith.mulf %168, %cst_43 : f32
    %170 = arith.mulf %163, %163 : f32
    %171 = arith.subf %169, %170 : f32
    %cst_44 = arith.constant 9.99999974E-6 : f32
    %172 = arith.addf %171, %cst_44 : f32
    %173 = math.rsqrt %172 : f32
    %174 = vector.broadcast %163 : f32 to vector<4x64xf32>
    %175 = arith.subf %154, %174 : vector<4x64xf32>
    %176 = vector.broadcast %173 : f32 to vector<4x64xf32>
    %177 = arith.mulf %175, %176 : vector<4x64xf32>
    %178 = vector.broadcast %156 : vector<4x1xf32> to vector<4x64xf32>
    %179 = arith.mulf %177, %178 : vector<4x64xf32>
    %180 = vector.broadcast %158 : vector<4x1xf32> to vector<4x64xf32>
    %181 = arith.addf %179, %180 : vector<4x64xf32>
    %182 = arith.addf %181, %1 : vector<4x64xf32>
    %cst_45 = arith.constant 5.000000e-01 : f32
    %183 = vector.broadcast %cst_45 : f32 to vector<4x64xf32>
    %184 = arith.mulf %183, %182 : vector<4x64xf32>
    %cst_46 = arith.constant 0.707106769 : f32
    %185 = vector.broadcast %cst_46 : f32 to vector<4x64xf32>
    %186 = arith.mulf %182, %185 : vector<4x64xf32>
    %187 = math.erf %186 : vector<4x64xf32>
    %cst_47 = arith.constant 1.000000e+00 : f32
    %188 = vector.broadcast %cst_47 : f32 to vector<4x64xf32>
    %189 = arith.addf %188, %187 : vector<4x64xf32>
    %190 = arith.mulf %184, %189 : vector<4x64xf32>
    %c0_48 = arith.constant 0 : index
    %c0_49 = arith.constant 0 : index
    %c0_50 = arith.constant 0 : index
    %191 = vector.load %arg5[%c0_48, %c0_49, %c0_50] : memref<1x4x64xf32, #tpu.memory_space<vmem>>, vector<1x4x64xf32>
    %192 = vector.shape_cast %191 : vector<1x4x64xf32> to vector<4x64xf32>
    %193 = vector.shape_cast %190 : vector<4x64xf32> to vector<1x4x64xf32>
    tpu.vector_store %arg5[%c0_48, %c0_49, %c0_50], %193 {strides = array<i32>} : memref<1x4x64xf32, #tpu.memory_space<vmem>>, vector<1x4x64xf32>,
    return
  }
  func.func @transform_0(%arg0: i32) -> (i32, i32, i32) {
    %c0_i32 = arith.constant 0 : i32
    %c0_i32_0 = arith.constant 0 : i32
    %c0_i32_1 = arith.constant 0 : i32
    return %arg0, %c0_i32, %c0_i32_0 : i32, i32, i32
  }
  func.func @transform_1(%arg0: i32) -> (i32, i32) {
    %c0_i32 = arith.constant 0 : i32
    %c0_i32_0 = arith.constant 0 : i32
    %c0_i32_1 = arith.constant 0 : i32
    return %c0_i32, %c0_i32_0 : i32, i32
  }
  func.func @transform_2(%arg0: i32) -> (i32, i32) {
    %c0_i32 = arith.constant 0 : i32
    %c0_i32_0 = arith.constant 0 : i32
    %c0_i32_1 = arith.constant 0 : i32
    return %c0_i32, %c0_i32_0 : i32, i32
  }
  func.func @transform_3(%arg0: i32) -> (i32, i32, i32) {
    %c0_i32 = arith.constant 0 : i32
    %c0_i32_0 = arith.constant 0 : i32
    %c0_i32_1 = arith.constant 0 : i32
    %c0_i32_2 = arith.constant 0 : i32
    return %c0_i32, %c0_i32_0, %c0_i32_1 : i32, i32, i32
  }
  func.func @transform_4(%arg0: i32) -> (i32, i32, i32) {
    %c0_i32 = arith.constant 0 : i32
    %c0_i32_0 = arith.constant 0 : i32
    %c0_i32_1 = arith.constant 0 : i32
    return %arg0, %c0_i32, %c0_i32_0 : i32, i32, i32
  }
}

module attributes {stable_mosaic.version = 11 : i64} {
  func.func @kernel(%arg0: memref<2x32xf32, #tpu.memory_space<vmem>>, %arg1: memref<32x8xf32, #tpu.memory_space<vmem>>, %arg2: memref<1x8xf32, #tpu.memory_space<vmem>>, %arg3: memref<2x8xf32, #tpu.memory_space<vmem>>) attributes {dimension_semantics = [], scalar_prefetch = 0 : i64, scratch_operands = 0 : i64, tpu.core_type = #tpu.core_type<tc>} {
    %c0 = arith.constant 0 : index
    %c0_0 = arith.constant 0 : index
    %0 = vector.load %arg0[%c0, %c0_0] : memref<2x32xf32, #tpu.memory_space<vmem>>, vector<2x32xf32>
    %1 = arith.negf %0 : vector<2x32xf32>
    %2 = math.exp %1 : vector<2x32xf32>
    %cst = arith.constant 1.000000e+00 : f32
    %3 = vector.broadcast %cst : f32 to vector<2x32xf32>
    %4 = arith.addf %3, %2 : vector<2x32xf32>
    %5 = arith.divf %3, %4 : vector<2x32xf32>
    %6 = arith.mulf %0, %5 : vector<2x32xf32>
    %c0_1 = arith.constant 0 : index
    %c0_2 = arith.constant 0 : index
    %7 = vector.load %arg1[%c0_1, %c0_2] : memref<32x8xf32, #tpu.memory_space<vmem>>, vector<32x8xf32>
    %cst_3 = arith.constant dense<0.000000e+00> : vector<2x8xf32>
    %8 = tpu.matmul %6, %7, %cst_3 {dimension_numbers = #tpu.dot_dimension_numbers<[1], [0], [0], [1], [0, 0, 1, 1], [], []>} : vector<2x32xf32>, vector<32x8xf32>, vector<2x8xf32> -> vector<2x8xf32>
    %c0_4 = arith.constant 0 : index
    %c0_5 = arith.constant 0 : index
    %9 = vector.load %arg2[%c0_4, %c0_5] : memref<1x8xf32, #tpu.memory_space<vmem>>, vector<1x8xf32>
    %10 = vector.broadcast %9 : vector<1x8xf32> to vector<2x8xf32>
    %11 = arith.addf %8, %10 : vector<2x8xf32>
    %c0_6 = arith.constant 0 : index
    %c0_7 = arith.constant 0 : index
    %12 = vector.load %arg3[%c0_6, %c0_7] : memref<2x8xf32, #tpu.memory_space<vmem>>, vector<2x8xf32>
    tpu.vector_store %arg3[%c0_6, %c0_7], %11 {strides = array<i32>} : memref<2x8xf32, #tpu.memory_space<vmem>>, vector<2x8xf32>,
    return
  }
}

module attributes {stable_mosaic.version = 11 : i64} {
  func.func @kernel(%arg0: i32, %arg1: memref<1x4x64xf32, #tpu.memory_space<vmem>>, %arg2: memref<8x36xbf16, #tpu.memory_space<vmem>>, %arg3: memref<8x72xbf16, #tpu.memory_space<vmem>>, %arg4: memref<6x8x1xf32, #tpu.memory_space<vmem>>, %arg5: memref<1x8x1xf32, #tpu.memory_space<vmem>>, %arg6: memref<1x8x64xf32, #tpu.memory_space<vmem>>) attributes {dimension_semantics = [#tpu.dimension_semantics<parallel>], iteration_bounds = array<i64: 2>, scalar_prefetch = 0 : i64, scratch_operands = 0 : i64, tpu.core_type = #tpu.core_type<tc>, window_params = [{transform_indices = @transform_0, window_bounds = array<i64: 1, 4, 64>}, {pipeline_mode = #tpu.pipeline_mode<synchronous>, transform_indices = @transform_1, window_bounds = array<i64: 8, 36>}, {pipeline_mode = #tpu.pipeline_mode<synchronous>, transform_indices = @transform_2, window_bounds = array<i64: 8, 72>}, {pipeline_mode = #tpu.pipeline_mode<synchronous>, transform_indices = @transform_3, window_bounds = array<i64: 6, 8, 1>}, {transform_indices = @transform_4, window_bounds = array<i64: 1, 8, 1>}, {transform_indices = @transform_5, window_bounds = array<i64: 1, 8, 64>}]} {
    %c0 = arith.constant 0 : index
    %c0_0 = arith.constant 0 : index
    %c0_1 = arith.constant 0 : index
    %0 = vector.load %arg1[%c0, %c0_0, %c0_1] : memref<1x4x64xf32, #tpu.memory_space<vmem>>, vector<1x4x64xf32>
    %1 = vector.shape_cast %0 : vector<1x4x64xf32> to vector<4x64xf32>
    %c0_2 = arith.constant 0 : index
    %c0_3 = arith.constant 0 : index
    %2 = vector.load %arg2[%c0_2, %c0_3] : memref<8x36xbf16, #tpu.memory_space<vmem>>, vector<8x36xbf16>
    %c0_4 = arith.constant 0 : index
    %c0_5 = arith.constant 0 : index
    %c0_6 = arith.constant 0 : index
    %3 = vector.load %arg4[%c0_4, %c0_5, %c0_6] : memref<6x8x1xf32, #tpu.memory_space<vmem>>, vector<1x8x1xf32>
    %4 = vector.shape_cast %3 : vector<1x8x1xf32> to vector<8x1xf32>
    %5 = vector.extract_strided_slice %1 {offsets = [0, 8], sizes = [4, 8], strides = [1, 1]} : vector<4x64xf32> to vector<4x8xf32>
    %6 = vector.extract_strided_slice %1 {offsets = [0, 48], sizes = [4, 8], strides = [1, 1]} : vector<4x64xf32> to vector<4x8xf32>
    %7 = tpu.concatenate %5, %1, %6 in 1 : vector<4x8xf32>, vector<4x64xf32>, vector<4x8xf32> -> vector<4x80xf32>
    %8 = tpu.iota {dimensions = array<i32: 1>} : vector<4x64xi32>
    %c8_i32 = arith.constant 8 : i32
    %c0_i32 = arith.constant 0 : i32
    %9 = arith.cmpi eq, %c8_i32, %c0_i32 : i32
    %c1_i32 = arith.constant 1 : i32
    %10 = arith.select %9, %c1_i32, %c8_i32 : i32
    %11 = vector.broadcast %10 : i32 to vector<4x64xi32>
    %12 = arith.remsi %8, %11 : vector<4x64xi32>
    %c0_i32_7 = arith.constant 0 : i32
    %13 = vector.broadcast %c0_i32_7 : i32 to vector<4x64xi32>
    %14 = arith.cmpi ne, %12, %13 : vector<4x64xi32>
    %c0_i32_8 = arith.constant 0 : i32
    %15 = vector.broadcast %c0_i32_8 : i32 to vector<4x64xi32>
    %16 = arith.cmpi slt, %12, %15 : vector<4x64xi32>
    %c0_i32_9 = arith.constant 0 : i32
    %17 = arith.cmpi slt, %10, %c0_i32_9 : i32
    %18 = vector.broadcast %17 : i1 to vector<4x64xi1>
    %19 = vector.broadcast %18 : vector<4x64xi1> to vector<4x64xi1>
    %20 = arith.xori %16, %19 : vector<4x64xi1>
    %21 = arith.andi %20, %14 : vector<4x64xi1>
    %22 = vector.broadcast %10 : i32 to vector<4x64xi32>
    %23 = arith.addi %12, %22 : vector<4x64xi32>
    %24 = arith.select %21, %23, %12 : vector<4x64xi1>, vector<4x64xi32>
    %c0_i32_10 = arith.constant 0 : i32
    %25 = vector.broadcast %c0_i32_10 : i32 to vector<4x64xi32>
    %26 = arith.cmpi eq, %24, %25 : vector<4x64xi32>
    %c7_i32 = arith.constant 7 : i32
    %27 = vector.broadcast %c7_i32 : i32 to vector<4x64xi32>
    %28 = arith.cmpi eq, %24, %27 : vector<4x64xi32>
    %29 = vector.extract_strided_slice %7 {offsets = [0, 0], sizes = [4, 64], strides = [1, 1]} : vector<4x80xf32> to vector<4x64xf32>
    %30 = vector.extract_strided_slice %29 {offsets = [0, 0], sizes = [4, 1], strides = [1, 1]} : vector<4x64xf32> to vector<4x1xf32>
    %31 = vector.extract_strided_slice %29 {offsets = [0, 0], sizes = [4, 63], strides = [1, 1]} : vector<4x64xf32> to vector<4x63xf32>
    %32 = tpu.concatenate %30, %31 in 1 : vector<4x1xf32>, vector<4x63xf32> -> vector<4x64xf32>
    %33 = vector.extract_strided_slice %29 {offsets = [0, 1], sizes = [4, 63], strides = [1, 1]} : vector<4x64xf32> to vector<4x63xf32>
    %34 = vector.extract_strided_slice %29 {offsets = [0, 63], sizes = [4, 1], strides = [1, 1]} : vector<4x64xf32> to vector<4x1xf32>
    %35 = tpu.concatenate %33, %34 in 1 : vector<4x63xf32>, vector<4x1xf32> -> vector<4x64xf32>
    %36 = arith.select %26, %35, %32 : vector<4x64xi1>, vector<4x64xf32>
    %37 = arith.select %28, %32, %35 : vector<4x64xi1>, vector<4x64xf32>
    %38 = vector.extract_strided_slice %7 {offsets = [0, 8], sizes = [4, 64], strides = [1, 1]} : vector<4x80xf32> to vector<4x64xf32>
    %39 = vector.extract_strided_slice %38 {offsets = [0, 0], sizes = [4, 1], strides = [1, 1]} : vector<4x64xf32> to vector<4x1xf32>
    %40 = vector.extract_strided_slice %38 {offsets = [0, 0], sizes = [4, 63], strides = [1, 1]} : vector<4x64xf32> to vector<4x63xf32>
    %41 = tpu.concatenate %39, %40 in 1 : vector<4x1xf32>, vector<4x63xf32> -> vector<4x64xf32>
    %42 = vector.extract_strided_slice %38 {offsets = [0, 1], sizes = [4, 63], strides = [1, 1]} : vector<4x64xf32> to vector<4x63xf32>
    %43 = vector.extract_strided_slice %38 {offsets = [0, 63], sizes = [4, 1], strides = [1, 1]} : vector<4x64xf32> to vector<4x1xf32>
    %44 = tpu.concatenate %42, %43 in 1 : vector<4x63xf32>, vector<4x1xf32> -> vector<4x64xf32>
    %45 = arith.select %26, %44, %41 : vector<4x64xi1>, vector<4x64xf32>
    %46 = arith.select %28, %41, %44 : vector<4x64xi1>, vector<4x64xf32>
    %47 = vector.extract_strided_slice %7 {offsets = [0, 16], sizes = [4, 64], strides = [1, 1]} : vector<4x80xf32> to vector<4x64xf32>
    %48 = vector.extract_strided_slice %47 {offsets = [0, 0], sizes = [4, 1], strides = [1, 1]} : vector<4x64xf32> to vector<4x1xf32>
    %49 = vector.extract_strided_slice %47 {offsets = [0, 0], sizes = [4, 63], strides = [1, 1]} : vector<4x64xf32> to vector<4x63xf32>
    %50 = tpu.concatenate %48, %49 in 1 : vector<4x1xf32>, vector<4x63xf32> -> vector<4x64xf32>
    %51 = vector.extract_strided_slice %47 {offsets = [0, 1], sizes = [4, 63], strides = [1, 1]} : vector<4x64xf32> to vector<4x63xf32>
    %52 = vector.extract_strided_slice %47 {offsets = [0, 63], sizes = [4, 1], strides = [1, 1]} : vector<4x64xf32> to vector<4x1xf32>
    %53 = tpu.concatenate %51, %52 in 1 : vector<4x63xf32>, vector<4x1xf32> -> vector<4x64xf32>
    %54 = arith.select %26, %53, %50 : vector<4x64xi1>, vector<4x64xf32>
    %55 = arith.select %28, %50, %53 : vector<4x64xi1>, vector<4x64xf32>
    %56 = tpu.concatenate %36, %29, %37, %45, %38, %46, %54, %47, %55 in 0 : vector<4x64xf32>, vector<4x64xf32>, vector<4x64xf32>, vector<4x64xf32>, vector<4x64xf32>, vector<4x64xf32>, vector<4x64xf32>, vector<4x64xf32>, vector<4x64xf32> -> vector<36x64xf32>
    %57 = arith.truncf %56 : vector<36x64xf32> to vector<36x64xbf16>
    %cst = arith.constant dense<0.000000e+00> : vector<8x64xf32>
    %58 = tpu.matmul %2, %57, %cst {dimension_numbers = #tpu.dot_dimension_numbers<[1], [0], [0], [1], [0, 0, 1, 1], [], []>} : vector<8x36xbf16>, vector<36x64xbf16>, vector<8x64xf32> -> vector<8x64xf32>
    %59 = vector.broadcast %4 : vector<8x1xf32> to vector<8x64xf32>
    %60 = arith.addf %58, %59 : vector<8x64xf32>
    %c1 = arith.constant 1 : index
    %c0_11 = arith.constant 0 : index
    %c0_12 = arith.constant 0 : index
    %61 = vector.load %arg4[%c1, %c0_11, %c0_12] : memref<6x8x1xf32, #tpu.memory_space<vmem>>, vector<1x8x1xf32>
    %62 = vector.shape_cast %61 : vector<1x8x1xf32> to vector<8x1xf32>
    %c2 = arith.constant 2 : index
    %c0_13 = arith.constant 0 : index
    %c0_14 = arith.constant 0 : index
    %63 = vector.load %arg4[%c2, %c0_13, %c0_14] : memref<6x8x1xf32, #tpu.memory_space<vmem>>, vector<1x8x1xf32>
    %64 = vector.shape_cast %63 : vector<1x8x1xf32> to vector<8x1xf32>
    %65 = vector.shape_cast %60 : vector<8x64xf32> to vector<1x8x64xf32>
    %cst_15 = arith.constant dense<0.000000e+00> : vector<1xf32>
    %66 = vector.multi_reduction <add>, %65, %cst_15 [1, 2] : vector<1x8x64xf32> to vector<1xf32>
    %67 = vector.shape_cast %66 : vector<1xf32> to vector<1x1x1xf32>
    %68 = vector.extract %67[0, 0, 0] : f32 from vector<1x1x1xf32>
    %cst_16 = arith.constant 0.001953125 : f32
    %69 = arith.mulf %68, %cst_16 : f32
    %70 = arith.mulf %60, %60 : vector<8x64xf32>
    %71 = vector.shape_cast %70 : vector<8x64xf32> to vector<1x8x64xf32>
    %cst_17 = arith.constant dense<0.000000e+00> : vector<1xf32>
    %72 = vector.multi_reduction <add>, %71, %cst_17 [1, 2] : vector<1x8x64xf32> to vector<1xf32>
    %73 = vector.shape_cast %72 : vector<1xf32> to vector<1x1x1xf32>
    %74 = vector.extract %73[0, 0, 0] : f32 from vector<1x1x1xf32>
    %cst_18 = arith.constant 0.001953125 : f32
    %75 = arith.mulf %74, %cst_18 : f32
    %76 = arith.mulf %69, %69 : f32
    %77 = arith.subf %75, %76 : f32
    %cst_19 = arith.constant 9.99999974E-6 : f32
    %78 = arith.addf %77, %cst_19 : f32
    %79 = math.rsqrt %78 : f32
    %80 = vector.broadcast %69 : f32 to vector<8x64xf32>
    %81 = arith.subf %60, %80 : vector<8x64xf32>
    %82 = vector.broadcast %79 : f32 to vector<8x64xf32>
    %83 = arith.mulf %81, %82 : vector<8x64xf32>
    %84 = vector.broadcast %62 : vector<8x1xf32> to vector<8x64xf32>
    %85 = arith.mulf %83, %84 : vector<8x64xf32>
    %86 = vector.broadcast %64 : vector<8x1xf32> to vector<8x64xf32>
    %87 = arith.addf %85, %86 : vector<8x64xf32>
    %cst_20 = arith.constant 5.000000e-01 : f32
    %88 = vector.broadcast %cst_20 : f32 to vector<8x64xf32>
    %89 = arith.mulf %88, %87 : vector<8x64xf32>
    %cst_21 = arith.constant 0.707106769 : f32
    %90 = vector.broadcast %cst_21 : f32 to vector<8x64xf32>
    %91 = arith.mulf %87, %90 : vector<8x64xf32>
    %92 = math.erf %91 : vector<8x64xf32>
    %cst_22 = arith.constant 1.000000e+00 : f32
    %93 = vector.broadcast %cst_22 : f32 to vector<8x64xf32>
    %94 = arith.addf %93, %92 : vector<8x64xf32>
    %95 = arith.mulf %89, %94 : vector<8x64xf32>
    %c0_23 = arith.constant 0 : index
    %c0_24 = arith.constant 0 : index
    %96 = vector.load %arg3[%c0_23, %c0_24] : memref<8x72xbf16, #tpu.memory_space<vmem>>, vector<8x72xbf16>
    %c3 = arith.constant 3 : index
    %c0_25 = arith.constant 0 : index
    %c0_26 = arith.constant 0 : index
    %97 = vector.load %arg4[%c3, %c0_25, %c0_26] : memref<6x8x1xf32, #tpu.memory_space<vmem>>, vector<1x8x1xf32>
    %98 = vector.shape_cast %97 : vector<1x8x1xf32> to vector<8x1xf32>
    %99 = vector.extract_strided_slice %95 {offsets = [0, 8], sizes = [8, 8], strides = [1, 1]} : vector<8x64xf32> to vector<8x8xf32>
    %100 = vector.extract_strided_slice %95 {offsets = [0, 48], sizes = [8, 8], strides = [1, 1]} : vector<8x64xf32> to vector<8x8xf32>
    %101 = tpu.concatenate %99, %95, %100 in 1 : vector<8x8xf32>, vector<8x64xf32>, vector<8x8xf32> -> vector<8x80xf32>
    %102 = tpu.iota {dimensions = array<i32: 1>} : vector<8x64xi32>
    %c8_i32_27 = arith.constant 8 : i32
    %c0_i32_28 = arith.constant 0 : i32
    %103 = arith.cmpi eq, %c8_i32_27, %c0_i32_28 : i32
    %c1_i32_29 = arith.constant 1 : i32
    %104 = arith.select %103, %c1_i32_29, %c8_i32_27 : i32
    %105 = vector.broadcast %104 : i32 to vector<8x64xi32>
    %106 = arith.remsi %102, %105 : vector<8x64xi32>
    %c0_i32_30 = arith.constant 0 : i32
    %107 = vector.broadcast %c0_i32_30 : i32 to vector<8x64xi32>
    %108 = arith.cmpi ne, %106, %107 : vector<8x64xi32>
    %c0_i32_31 = arith.constant 0 : i32
    %109 = vector.broadcast %c0_i32_31 : i32 to vector<8x64xi32>
    %110 = arith.cmpi slt, %106, %109 : vector<8x64xi32>
    %c0_i32_32 = arith.constant 0 : i32
    %111 = arith.cmpi slt, %104, %c0_i32_32 : i32
    %112 = vector.broadcast %111 : i1 to vector<8x64xi1>
    %113 = vector.broadcast %112 : vector<8x64xi1> to vector<8x64xi1>
    %114 = arith.xori %110, %113 : vector<8x64xi1>
    %115 = arith.andi %114, %108 : vector<8x64xi1>
    %116 = vector.broadcast %104 : i32 to vector<8x64xi32>
    %117 = arith.addi %106, %116 : vector<8x64xi32>
    %118 = arith.select %115, %117, %106 : vector<8x64xi1>, vector<8x64xi32>
    %c0_i32_33 = arith.constant 0 : i32
    %119 = vector.broadcast %c0_i32_33 : i32 to vector<8x64xi32>
    %120 = arith.cmpi eq, %118, %119 : vector<8x64xi32>
    %c7_i32_34 = arith.constant 7 : i32
    %121 = vector.broadcast %c7_i32_34 : i32 to vector<8x64xi32>
    %122 = arith.cmpi eq, %118, %121 : vector<8x64xi32>
    %123 = vector.extract_strided_slice %101 {offsets = [0, 0], sizes = [8, 64], strides = [1, 1]} : vector<8x80xf32> to vector<8x64xf32>
    %124 = vector.extract_strided_slice %123 {offsets = [0, 0], sizes = [8, 1], strides = [1, 1]} : vector<8x64xf32> to vector<8x1xf32>
    %125 = vector.extract_strided_slice %123 {offsets = [0, 0], sizes = [8, 63], strides = [1, 1]} : vector<8x64xf32> to vector<8x63xf32>
    %126 = tpu.concatenate %124, %125 in 1 : vector<8x1xf32>, vector<8x63xf32> -> vector<8x64xf32>
    %127 = vector.extract_strided_slice %123 {offsets = [0, 1], sizes = [8, 63], strides = [1, 1]} : vector<8x64xf32> to vector<8x63xf32>
    %128 = vector.extract_strided_slice %123 {offsets = [0, 63], sizes = [8, 1], strides = [1, 1]} : vector<8x64xf32> to vector<8x1xf32>
    %129 = tpu.concatenate %127, %128 in 1 : vector<8x63xf32>, vector<8x1xf32> -> vector<8x64xf32>
    %130 = arith.select %120, %129, %126 : vector<8x64xi1>, vector<8x64xf32>
    %131 = arith.select %122, %126, %129 : vector<8x64xi1>, vector<8x64xf32>
    %132 = vector.extract_strided_slice %101 {offsets = [0, 8], sizes = [8, 64], strides = [1, 1]} : vector<8x80xf32> to vector<8x64xf32>
    %133 = vector.extract_strided_slice %132 {offsets = [0, 0], sizes = [8, 1], strides = [1, 1]} : vector<8x64xf32> to vector<8x1xf32>
    %134 = vector.extract_strided_slice %132 {offsets = [0, 0], sizes = [8, 63], strides = [1, 1]} : vector<8x64xf32> to vector<8x63xf32>
    %135 = tpu.concatenate %133, %134 in 1 : vector<8x1xf32>, vector<8x63xf32> -> vector<8x64xf32>
    %136 = vector.extract_strided_slice %132 {offsets = [0, 1], sizes = [8, 63], strides = [1, 1]} : vector<8x64xf32> to vector<8x63xf32>
    %137 = vector.extract_strided_slice %132 {offsets = [0, 63], sizes = [8, 1], strides = [1, 1]} : vector<8x64xf32> to vector<8x1xf32>
    %138 = tpu.concatenate %136, %137 in 1 : vector<8x63xf32>, vector<8x1xf32> -> vector<8x64xf32>
    %139 = arith.select %120, %138, %135 : vector<8x64xi1>, vector<8x64xf32>
    %140 = arith.select %122, %135, %138 : vector<8x64xi1>, vector<8x64xf32>
    %141 = vector.extract_strided_slice %101 {offsets = [0, 16], sizes = [8, 64], strides = [1, 1]} : vector<8x80xf32> to vector<8x64xf32>
    %142 = vector.extract_strided_slice %141 {offsets = [0, 0], sizes = [8, 1], strides = [1, 1]} : vector<8x64xf32> to vector<8x1xf32>
    %143 = vector.extract_strided_slice %141 {offsets = [0, 0], sizes = [8, 63], strides = [1, 1]} : vector<8x64xf32> to vector<8x63xf32>
    %144 = tpu.concatenate %142, %143 in 1 : vector<8x1xf32>, vector<8x63xf32> -> vector<8x64xf32>
    %145 = vector.extract_strided_slice %141 {offsets = [0, 1], sizes = [8, 63], strides = [1, 1]} : vector<8x64xf32> to vector<8x63xf32>
    %146 = vector.extract_strided_slice %141 {offsets = [0, 63], sizes = [8, 1], strides = [1, 1]} : vector<8x64xf32> to vector<8x1xf32>
    %147 = tpu.concatenate %145, %146 in 1 : vector<8x63xf32>, vector<8x1xf32> -> vector<8x64xf32>
    %148 = arith.select %120, %147, %144 : vector<8x64xi1>, vector<8x64xf32>
    %149 = arith.select %122, %144, %147 : vector<8x64xi1>, vector<8x64xf32>
    %150 = tpu.concatenate %130, %123, %131, %139, %132, %140, %148, %141, %149 in 0 : vector<8x64xf32>, vector<8x64xf32>, vector<8x64xf32>, vector<8x64xf32>, vector<8x64xf32>, vector<8x64xf32>, vector<8x64xf32>, vector<8x64xf32>, vector<8x64xf32> -> vector<72x64xf32>
    %151 = arith.truncf %150 : vector<72x64xf32> to vector<72x64xbf16>
    %cst_35 = arith.constant dense<0.000000e+00> : vector<8x64xf32>
    %152 = tpu.matmul %96, %151, %cst_35 {dimension_numbers = #tpu.dot_dimension_numbers<[1], [0], [0], [1], [0, 0, 1, 1], [], []>} : vector<8x72xbf16>, vector<72x64xbf16>, vector<8x64xf32> -> vector<8x64xf32>
    %153 = vector.broadcast %98 : vector<8x1xf32> to vector<8x64xf32>
    %154 = arith.addf %152, %153 : vector<8x64xf32>
    %c4 = arith.constant 4 : index
    %c0_36 = arith.constant 0 : index
    %c0_37 = arith.constant 0 : index
    %155 = vector.load %arg4[%c4, %c0_36, %c0_37] : memref<6x8x1xf32, #tpu.memory_space<vmem>>, vector<1x8x1xf32>
    %156 = vector.shape_cast %155 : vector<1x8x1xf32> to vector<8x1xf32>
    %c5 = arith.constant 5 : index
    %c0_38 = arith.constant 0 : index
    %c0_39 = arith.constant 0 : index
    %157 = vector.load %arg4[%c5, %c0_38, %c0_39] : memref<6x8x1xf32, #tpu.memory_space<vmem>>, vector<1x8x1xf32>
    %158 = vector.shape_cast %157 : vector<1x8x1xf32> to vector<8x1xf32>
    %159 = vector.shape_cast %154 : vector<8x64xf32> to vector<1x8x64xf32>
    %cst_40 = arith.constant dense<0.000000e+00> : vector<1xf32>
    %160 = vector.multi_reduction <add>, %159, %cst_40 [1, 2] : vector<1x8x64xf32> to vector<1xf32>
    %161 = vector.shape_cast %160 : vector<1xf32> to vector<1x1x1xf32>
    %162 = vector.extract %161[0, 0, 0] : f32 from vector<1x1x1xf32>
    %cst_41 = arith.constant 0.001953125 : f32
    %163 = arith.mulf %162, %cst_41 : f32
    %164 = arith.mulf %154, %154 : vector<8x64xf32>
    %165 = vector.shape_cast %164 : vector<8x64xf32> to vector<1x8x64xf32>
    %cst_42 = arith.constant dense<0.000000e+00> : vector<1xf32>
    %166 = vector.multi_reduction <add>, %165, %cst_42 [1, 2] : vector<1x8x64xf32> to vector<1xf32>
    %167 = vector.shape_cast %166 : vector<1xf32> to vector<1x1x1xf32>
    %168 = vector.extract %167[0, 0, 0] : f32 from vector<1x1x1xf32>
    %cst_43 = arith.constant 0.001953125 : f32
    %169 = arith.mulf %168, %cst_43 : f32
    %170 = arith.mulf %163, %163 : f32
    %171 = arith.subf %169, %170 : f32
    %cst_44 = arith.constant 9.99999974E-6 : f32
    %172 = arith.addf %171, %cst_44 : f32
    %173 = math.rsqrt %172 : f32
    %174 = vector.broadcast %163 : f32 to vector<8x64xf32>
    %175 = arith.subf %154, %174 : vector<8x64xf32>
    %176 = vector.broadcast %173 : f32 to vector<8x64xf32>
    %177 = arith.mulf %175, %176 : vector<8x64xf32>
    %178 = vector.broadcast %156 : vector<8x1xf32> to vector<8x64xf32>
    %179 = arith.mulf %177, %178 : vector<8x64xf32>
    %180 = vector.broadcast %158 : vector<8x1xf32> to vector<8x64xf32>
    %181 = arith.addf %179, %180 : vector<8x64xf32>
    %cst_45 = arith.constant 5.000000e-01 : f32
    %182 = vector.broadcast %cst_45 : f32 to vector<8x64xf32>
    %183 = arith.mulf %182, %181 : vector<8x64xf32>
    %cst_46 = arith.constant 0.707106769 : f32
    %184 = vector.broadcast %cst_46 : f32 to vector<8x64xf32>
    %185 = arith.mulf %181, %184 : vector<8x64xf32>
    %186 = math.erf %185 : vector<8x64xf32>
    %cst_47 = arith.constant 1.000000e+00 : f32
    %187 = vector.broadcast %cst_47 : f32 to vector<8x64xf32>
    %188 = arith.addf %187, %186 : vector<8x64xf32>
    %189 = arith.mulf %183, %188 : vector<8x64xf32>
    %c0_48 = arith.constant 0 : index
    %c0_49 = arith.constant 0 : index
    %c0_50 = arith.constant 0 : index
    %190 = vector.load %arg5[%c0_48, %c0_49, %c0_50] : memref<1x8x1xf32, #tpu.memory_space<vmem>>, vector<1x8x1xf32>
    %191 = vector.shape_cast %190 : vector<1x8x1xf32> to vector<8x1xf32>
    %192 = vector.broadcast %191 : vector<8x1xf32> to vector<8x64xf32>
    %193 = arith.addf %189, %192 : vector<8x64xf32>
    %c0_51 = arith.constant 0 : index
    %c0_52 = arith.constant 0 : index
    %c0_53 = arith.constant 0 : index
    %194 = vector.load %arg6[%c0_51, %c0_52, %c0_53] : memref<1x8x64xf32, #tpu.memory_space<vmem>>, vector<1x8x64xf32>
    %195 = vector.shape_cast %194 : vector<1x8x64xf32> to vector<8x64xf32>
    %196 = vector.shape_cast %193 : vector<8x64xf32> to vector<1x8x64xf32>
    tpu.vector_store %arg6[%c0_51, %c0_52, %c0_53], %196 {strides = array<i32>} : memref<1x8x64xf32, #tpu.memory_space<vmem>>, vector<1x8x64xf32>,
    return
  }
  func.func @transform_0(%arg0: i32) -> (i32, i32, i32) {
    %c0_i32 = arith.constant 0 : i32
    %c0_i32_0 = arith.constant 0 : i32
    %c0_i32_1 = arith.constant 0 : i32
    return %arg0, %c0_i32, %c0_i32_0 : i32, i32, i32
  }
  func.func @transform_1(%arg0: i32) -> (i32, i32) {
    %c0_i32 = arith.constant 0 : i32
    %c0_i32_0 = arith.constant 0 : i32
    %c0_i32_1 = arith.constant 0 : i32
    return %c0_i32, %c0_i32_0 : i32, i32
  }
  func.func @transform_2(%arg0: i32) -> (i32, i32) {
    %c0_i32 = arith.constant 0 : i32
    %c0_i32_0 = arith.constant 0 : i32
    %c0_i32_1 = arith.constant 0 : i32
    return %c0_i32, %c0_i32_0 : i32, i32
  }
  func.func @transform_3(%arg0: i32) -> (i32, i32, i32) {
    %c0_i32 = arith.constant 0 : i32
    %c0_i32_0 = arith.constant 0 : i32
    %c0_i32_1 = arith.constant 0 : i32
    %c0_i32_2 = arith.constant 0 : i32
    return %c0_i32, %c0_i32_0, %c0_i32_1 : i32, i32, i32
  }
  func.func @transform_4(%arg0: i32) -> (i32, i32, i32) {
    %c0_i32 = arith.constant 0 : i32
    %c0_i32_0 = arith.constant 0 : i32
    %c0_i32_1 = arith.constant 0 : i32
    return %arg0, %c0_i32, %c0_i32_0 : i32, i32, i32
  }
  func.func @transform_5(%arg0: i32) -> (i32, i32, i32) {
    %c0_i32 = arith.constant 0 : i32
    %c0_i32_0 = arith.constant 0 : i32
    %c0_i32_1 = arith.constant 0 : i32
    return %arg0, %c0_i32, %c0_i32_0 : i32, i32, i32
  }
}

</mosaic_0001>

<llo_original>
// kernel: downsample_pallas.4
$region0: #{downsample_pallas.4}
  #allocation0 [shape = 'u32[]', space=smem, size = 0x4, offset = 0x4, fixed_abs, tag = 'smem constant byte address 0x4 - core index']
  #allocation1 [shape = 'u32[144,128]{1,0:T(1,128)}', space=vmem, size = 0x12000, scoped, tag = 'internal scratch']
  %s0 = inlined_call_operand.vmem [shape: f32[2,32], index: 0, kind: input, shape index: {}]
  %s1 = inlined_call_operand.vmem [shape: f32[32,8], index: 1, kind: input, shape index: {}]
  %s2 = inlined_call_operand.vmem [shape: f32[1,8], index: 2, kind: input, shape index: {}]
  %s3 = inlined_call_operand.vmem [shape: f32[2,8], index: 3, kind: output, shape index: {}]
  %s4 = sld [smem:[#allocation0]]
  $region22: #{downsample_pallas.4} parent=0
    _
  %s6 = ssub.s32 1, %s4
  %s7 = scalar_select 0, %s6, %s4
  // Predicated region
  $region2: #{downsample_pallas.4} parent=0 // pred_check
    _
  $region3: #{downsample_pallas.4} parent=0 // pred_check_branch
    %9 = sbr.rel (0) target = $region5
  $region4: #{downsample_pallas.4} parent=0 // pred_region
    _
  $region5: #{downsample_pallas.4} parent=0 // pred_fallthru
    _
  // Predicated region
  $region6: #{downsample_pallas.4} parent=0 // pred_check
    _
  $region7: #{downsample_pallas.4} parent=0 // pred_check_branch
    %11 = sbr.rel (0) target = $region9
  $region8: #{downsample_pallas.4} parent=0 // pred_region
    _
  $region9: #{downsample_pallas.4} parent=0 // pred_fallthru
    _
  // Predicated region
  $region10: #{downsample_pallas.4} parent=0 // pred_check
    _
  $region11: #{downsample_pallas.4} parent=0 // pred_check_branch
    %13 = sbr.rel (0) target = $region13
  $region12: #{downsample_pallas.4} parent=0 // pred_region
    _
  $region13: #{downsample_pallas.4} parent=0 // pred_fallthru
    _
  %v14 = vld [vmem:[%s0] sm:$0x3]
  %v15 = vxor.u32 %v14, 2147483648
  %v16 = vmul.f32 %v15, 1.442695
  %v17 = vpow.pop %v16
  %v18 = vadd.f32 %v17, 1.0
  %v19 = vrcp.pop %v18
  %v20 = vmul.f32 1.0, %v19
  %v21 = vmul.f32 %v14, %v20
  %v22 = vld [vmem:[%s1] sm:$0xff]
  %v23 = vld [vmem:[%s1 + $0x8] sm:$0xff]
  %v24 = vld [vmem:[%s1 + $0x10] sm:$0xff]
  %v25 = vld [vmem:[%s1 + $0x18] sm:$0xff]
  %v26 = vld [vmem:[%s2] sm:$0x1]
  %v28 = vlaneseq
  %v29 = vshrl.u32 %v28, 7
  %v30 = vsub.s32 0, %v29
  %v31 = vrot.slane %v26, %v30
  %vm33 = vcmask 261120
  %v35 = vsel %vm33, %v21, 0
  %37 = vmatprep.subr.mxu0 0.0
  %38 = vmatpush1.msra.mxu0 0.0
  %39 = vmatprep.subr.mxu0 0.0
  %40 = vmatpush1.msra.mxu0 0.0
  %41 = vmatprep.subr.mxu0 0.0
  %42 = vmatpush1.msra.mxu0 0.0
  %43 = vmatprep.subr.mxu0 0.0
  %44 = vmatpush1.msra.mxu0 0.0
  %45 = vmatprep.subr.mxu0 0.0
  %46 = vmatpush1.msra.mxu0 0.0
  %47 = vmatprep.subr.mxu0 0.0
  %48 = vmatpush1.msra.mxu0 0.0
  %49 = vmatprep.subr.mxu0 0.0
  %50 = vmatpush1.msra.mxu0 0.0
  %51 = vmatprep.subr.mxu0 0.0
  %52 = vmatpush1.msra.mxu0 0.0
  %53 = vmatprep.subr.mxu0 0.0
  %54 = vmatpush1.msra.mxu0 0.0
  %55 = vmatprep.subr.mxu0 0.0
  %56 = vmatpush1.msra.mxu0 0.0
  %57 = vmatprep.subr.mxu0 0.0
  %58 = vmatpush1.msra.mxu0 0.0
  %59 = vmatprep.subr.mxu0 0.0
  %60 = vmatpush1.msra.mxu0 0.0
  %61 = vmatprep.subr.mxu0 0.0
  %62 = vmatpush1.msra.mxu0 %v25
  %63 = vmatprep.subr.mxu0 0.0
  %64 = vmatpush1.msra.mxu0 %v24
  %65 = vmatprep.subr.mxu0 0.0
  %66 = vmatpush1.msra.mxu0 %v23
  %67 = vmatprep.subr.mxu0 0.0
  %68 = vmatpush1.msra.mxu0 %v22
  %69 = vmatprep.subr.mxu0 0.0
  %70 = vmatpush2.msra.mxu0 0.0
  %71 = vmatprep.subr.mxu0 0.0
  %72 = vmatpush2.msra.mxu0 0.0
  %73 = vmatprep.subr.mxu0 0.0
  %74 = vmatpush2.msra.mxu0 0.0
  %75 = vmatprep.subr.mxu0 0.0
  %76 = vmatpush2.msra.mxu0 0.0
  %77 = vmatprep.subr.mxu0 0.0
  %78 = vmatpush2.msra.mxu0 0.0
  %79 = vmatprep.subr.mxu0 0.0
  %80 = vmatpush2.msra.mxu0 0.0
  %81 = vmatprep.subr.mxu0 0.0
  %82 = vmatpush2.msra.mxu0 0.0
  %83 = vmatprep.subr.mxu0 0.0
  %84 = vmatpush2.msra.mxu0 0.0
  %85 = vmatprep.subr.mxu0 0.0
  %86 = vmatpush2.msra.mxu0 0.0
  %87 = vmatprep.subr.mxu0 0.0
  %88 = vmatpush2.msra.mxu0 0.0
  %89 = vmatprep.subr.mxu0 0.0
  %90 = vmatpush2.msra.mxu0 0.0
  %91 = vmatprep.subr.mxu0 0.0
  %92 = vmatpush2.msra.mxu0 0.0
  %93 = vmatprep.subr.mxu0 0.0
  %94 = vmatpush2.msra.mxu0 0.0
  %95 = vmatprep.subr.mxu0 0.0
  %96 = vmatpush2.msra.mxu0 0.0
  %97 = vmatprep.subr.mxu0 0.0
  %98 = vmatpush2.msra.mxu0 0.0
  %99 = vmatprep.subr.mxu0 0.0
  %100 = vmatpush2.msra.mxu0 0.0
  %101 = vmatprep.mubr.f32.mxu0 0.0
  %102 = vmatmul.mubr.f32.gmra.mxu0 %v35
  %v103 = vpop.f32.mrf.mxu0
  %v104 = vadd.f32 %v31, %v103
  %v105 = vpop.f32.mrf.mxu0
  %106 = vdwg.mxu0
  %vm107 = vcmask 58368
  %108 = vst.msk [vmem:[%s3] sm:$0x3] %vm107, %v104
  // Predicated region
  $region14: #{downsample_pallas.4} parent=0 // pred_check
    _
  $region15: #{downsample_pallas.4} parent=0 // pred_check_branch
    %110 = sbr.rel (0) target = $region17
  $region16: #{downsample_pallas.4} parent=0 // pred_region
    _
  $region17: #{downsample_pallas.4} parent=0 // pred_fallthru
    _
  // Predicated region
  $region18: #{downsample_pallas.4} parent=0 // pred_check
    _
  $region19: #{downsample_pallas.4} parent=0 // pred_check_branch
    %112 = sbr.rel (0) target = $region21
  $region20: #{downsample_pallas.4} parent=0 // pred_region
    _
  $region21: #{downsample_pallas.4} parent=0 // pred_fallthru
    _

// kernel: downsample_pallas.3
$region0: #{downsample_pallas.3}
  #allocation0 [shape = 'u32[]', space=smem, size = 0x4, offset = 0x4, fixed_abs, tag = 'smem constant byte address 0x4 - core index']
  #allocation1 [shape = 'u32[144,128]{1,0:T(1,128)}', space=vmem, size = 0x12000, scoped, tag = 'internal scratch']
  %s0 = inlined_call_operand.vmem [shape: f32[2,4,64], index: 0, kind: input, shape index: {}]
  %s1 = inlined_call_operand.vmem [shape: bf16[4,36], index: 1, kind: input, shape index: {}]
  %s2 = inlined_call_operand.vmem [shape: bf16[4,36], index: 2, kind: input, shape index: {}]
  %s3 = inlined_call_operand.vmem [shape: f32[6,4,1], index: 3, kind: input, shape index: {}]
  %s4 = inlined_call_operand.vmem [shape: f32[2,4,64], index: 4, kind: output, shape index: {}]
  %s5 = sld [smem:[#allocation0]]
  $region49: #{downsample_pallas.3} parent=0
    _
  %s7 = ssub.s32 1, %s5
  %s8 = scalar_select 0, %s7, %s5
  loop: start=0, step=1, limit=4
  $region2: #{downsample_pallas.3} parent=0 // loop_pre_header
    _
  $region3: #{downsample_pallas.3} parent=0 // loop_header
    %s10 = sphi 0, %s14
    %p11 = scmp.ge.s32.totalorder %s10, 4
    %s20 = sphi 0, %s22
    %s23 = sphi 0, %s20
    %s24 = sphi 0, %s23
    %s40 = sphi 0, %s24
    %s44 = sphi 0, %s44
    %s46 = sphi 0, %s44
    %s47 = sphi 0, %s46
    %s61 = sphi 0, %s47
    %s65 = sphi 0, %s65
    %s67 = sphi 0, %s65
    %s68 = sphi 0, %s67
    %s82 = sphi 0, %s68
    %s86 = sphi 0, %s86
    %s88 = sphi 0, %s86
    %s89 = sphi 0, %s88
    %s103 = sphi 0, %s89
    %s109 = sphi 0, %s111
    %s112 = sphi 0, %s109
    %s113 = sphi 0, %s112
    %s129 = sphi 0, %s113
  $region4: #{downsample_pallas.3} parent=0 // loop_header_branch
    %13 = sbr.rel (%p11) target = $region8
  $region5: #{downsample_pallas.3} parent=0 // loop_body
    %s15 = ssub.s32 %s10, 1
    %s16 = ssub.s32 %s10, 2
    %s17 = sadd.s32 %s10, 1
    %s18 = ssub.s32 %s10, %s17
    %p19 = scmp.eq.s32.totalorder %s18, 0
    %s21 = sadd.s32 %s20, 1
    %s22 = scalar_select %p19, %s20, %s21
    %p25 = pneg %p19
    %p26 = scmp.eq.s32.totalorder %s10, 1
    %p27 = por %p25, %p26
    %p28 = scmp.ne.s32.totalorder %s20, %s23
    %p29 = scmp.eq.s32.totalorder %s10, 0
    %p30 = por %p28, %p29
    %p31 = scmp.ne.s32.totalorder %s20, %s23
    %p32 = scmp.eq.s32.totalorder %s15, 1
    %p33 = por %p31, %p32
    %p34 = scmp.ne.s32.totalorder %s23, %s24
    %p35 = scmp.eq.s32.totalorder %s15, 0
    %p36 = por %p34, %p35
    %p37 = scmp.ne.s32.totalorder %s23, %s24
    %p38 = scmp.eq.s32.totalorder %s16, 1
    %p39 = por %p37, %p38
    %p41 = scmp.ne.s32.totalorder %s24, %s40
    %p42 = scmp.eq.s32.totalorder %s16, 0
    %p43 = por %p41, %p42
    %s45 = sadd.s32 %s44, 1
    %p48 = scmp.eq.s32.totalorder %s10, 1
    %p49 = scmp.ne.s32.totalorder %s44, %s46
    %p50 = scmp.eq.s32.totalorder %s10, 0
    %p51 = por %p49, %p50
    %p52 = scmp.ne.s32.totalorder %s44, %s46
    %p53 = scmp.eq.s32.totalorder %s15, 1
    %p54 = por %p52, %p53
    %p55 = scmp.ne.s32.totalorder %s46, %s47
    %p56 = scmp.eq.s32.totalorder %s15, 0
    %p57 = por %p55, %p56
    %p58 = scmp.ne.s32.totalorder %s46, %s47
    %p59 = scmp.eq.s32.totalorder %s16, 1
    %p60 = por %p58, %p59
    %p62 = scmp.ne.s32.totalorder %s47, %s61
    %p63 = scmp.eq.s32.totalorder %s16, 0
    %p64 = por %p62, %p63
    %s66 = sadd.s32 %s65, 1
    %p69 = scmp.eq.s32.totalorder %s10, 1
    %p70 = scmp.ne.s32.totalorder %s65, %s67
    %p71 = scmp.eq.s32.totalorder %s10, 0
    %p72 = por %p70, %p71
    %p73 = scmp.ne.s32.totalorder %s65, %s67
    %p74 = scmp.eq.s32.totalorder %s15, 1
    %p75 = por %p73, %p74
    %p76 = scmp.ne.s32.totalorder %s67, %s68
    %p77 = scmp.eq.s32.totalorder %s15, 0
    %p78 = por %p76, %p77
    %p79 = scmp.ne.s32.totalorder %s67, %s68
    %p80 = scmp.eq.s32.totalorder %s16, 1
    %p81 = por %p79, %p80
    %p83 = scmp.ne.s32.totalorder %s68, %s82
    %p84 = scmp.eq.s32.totalorder %s16, 0
    %p85 = por %p83, %p84
    %s87 = sadd.s32 %s86, 1
    %p90 = scmp.eq.s32.totalorder %s10, 1
    %p91 = scmp.ne.s32.totalorder %s86, %s88
    %p92 = scmp.eq.s32.totalorder %s10, 0
    %p93 = por %p91, %p92
    %p94 = scmp.ne.s32.totalorder %s86, %s88
    %p95 = scmp.eq.s32.totalorder %s15, 1
    %p96 = por %p94, %p95
    %p97 = scmp.ne.s32.totalorder %s88, %s89
    %p98 = scmp.eq.s32.totalorder %s15, 0
    %p99 = por %p97, %p98
    %p100 = scmp.ne.s32.totalorder %s88, %s89
    %p101 = scmp.eq.s32.totalorder %s16, 1
    %p102 = por %p100, %p101
    %p104 = scmp.ne.s32.totalorder %s89, %s103
    %p105 = scmp.eq.s32.totalorder %s16, 0
    %p106 = por %p104, %p105
    %s107 = ssub.s32 %s10, %s17
    %p108 = scmp.eq.s32.totalorder %s107, 0
    %s110 = sadd.s32 %s109, 1
    %s111 = scalar_select %p108, %s109, %s110
    %p114 = pneg %p108
    %p115 = scmp.eq.s32.totalorder %s10, 1
    %p116 = por %p114, %p115
    %p117 = scmp.ne.s32.totalorder %s109, %s112
    %p118 = scmp.eq.s32.totalorder %s10, 0
    %p119 = por %p117, %p118
    %p120 = scmp.ne.s32.totalorder %s109, %s112
    %p121 = scmp.eq.s32.totalorder %s15, 1
    %p122 = por %p120, %p121
    %p123 = scmp.ne.s32.totalorder %s112, %s113
    %p124 = scmp.eq.s32.totalorder %s15, 0
    %p125 = por %p123, %p124
    %p126 = scmp.ne.s32.totalorder %s112, %s113
    %p127 = scmp.eq.s32.totalorder %s16, 1
    %p128 = por %p126, %p127
    %p130 = scmp.ne.s32.totalorder %s113, %s129
    %p131 = scmp.eq.s32.totalorder %s16, 0
    %p132 = por %p130, %p131
    %p133 = scmp.le.s32.totalorder 1, %s10
    %p134 = scmp.lt.s32.totalorder %s10, 3
    %p135 = pnand %p133, %p134
    %p136 = pneg %p135
    // Predicated region
    $region9: #{downsample_pallas.3} parent=5 // pred_check
      _
    $region10: #{downsample_pallas.3} parent=5 // pred_check_branch
      %138 = sbr.rel (%p135) target = $region12
    $region11: #{downsample_pallas.3} parent=5 // pred_region
      %s139 = ssub.s32 %s10, 1
      // Predicated region
      $region13: #{downsample_pallas.3} parent=11 // pred_check
        %p140 = pneg %p57
      $region14: #{downsample_pallas.3} parent=11 // pred_check_branch
        %142 = sbr.rel (%p140) target = $region16
      $region15: #{downsample_pallas.3} parent=11 // pred_region
        _
      $region16: #{downsample_pallas.3} parent=11 // pred_fallthru
        _
      // Predicated region
      $region17: #{downsample_pallas.3} parent=11 // pred_check
        %p143 = pneg %p78
      $region18: #{downsample_pallas.3} parent=11 // pred_check_branch
        %145 = sbr.rel (%p143) target = $region20
      $region19: #{downsample_pallas.3} parent=11 // pred_region
        _
      $region20: #{downsample_pallas.3} parent=11 // pred_fallthru
        _
      // Predicated region
      $region21: #{downsample_pallas.3} parent=11 // pred_check
        %p146 = pneg %p99
      $region22: #{downsample_pallas.3} parent=11 // pred_check_branch
        %148 = sbr.rel (%p146) target = $region24
      $region23: #{downsample_pallas.3} parent=11 // pred_region
        _
      $region24: #{downsample_pallas.3} parent=11 // pred_fallthru
        _
    $region12: #{downsample_pallas.3} parent=5 // pred_fallthru
      _
    %p149 = scmp.lt.s32.totalorder %s10, 2
    // Predicated region
    $region25: #{downsample_pallas.3} parent=5 // pred_check
      %p150 = pneg %p149
    $region26: #{downsample_pallas.3} parent=5 // pred_check_branch
      %152 = sbr.rel (%p150) target = $region28
    $region27: #{downsample_pallas.3} parent=5 // pred_region
      // Predicated region
      $region29: #{downsample_pallas.3} parent=27 // pred_check
        %p153 = pneg %p30
      $region30: #{downsample_pallas.3} parent=27 // pred_check_branch
        %155 = sbr.rel (%p153) target = $region32
      $region31: #{downsample_pallas.3} parent=27 // pred_region
        %p156 = scmp.lt.s32.totalorder %s10, 1
        %s157 = scalar_select %p156, %s10, 1
        %s158 = smul.addr %s157, 4
        %s159 = scalar_lea.vmem %s0, %s158
      $region32: #{downsample_pallas.3} parent=27 // pred_fallthru
        _
    $region28: #{downsample_pallas.3} parent=5 // pred_fallthru
      _
    %p160 = scmp.le.s32.totalorder 1, %s10
    %p161 = scmp.lt.s32.totalorder %s10, 3
    %p162 = pnand %p160, %p161
    %p163 = pneg %p162
    // Predicated region
    $region33: #{downsample_pallas.3} parent=5 // pred_check
      _
    $region34: #{downsample_pallas.3} parent=5 // pred_check_branch
      %165 = sbr.rel (%p162) target = $region36
    $region35: #{downsample_pallas.3} parent=5 // pred_region
      %s166 = ssub.s32 %s10, 1
      %p167 = scmp.lt.s32.totalorder %s15, 1
      %s168 = scalar_select %p167, %s15, 1
      %s169 = smul.addr %s168, 4
      %s170 = scalar_lea.vmem %s0, %s169
      %p171 = pneg %p36
      %p172 = pneg %p33
      %p173 = pneg %p57
      %p174 = pneg %p54
      %p175 = pneg %p78
      %p176 = pneg %p75
      %p177 = pneg %p99
      %p178 = pneg %p96
      %p179 = pneg %p125
      %p180 = pneg %p122
      %p181 = scmp.lt.s32.totalorder %s15, 1
      %s182 = scalar_select %p181, %s15, 1
      %s183 = smul.addr %s182, 4
      %s184 = scalar_lea.vmem %s4, %s183
      %p185 = scmp.lt.s32.totalorder %s15, 1
      %s186 = scalar_select %p185, %s15, 1
      %s187 = smul.addr %s186, 4
      %s188 = scalar_lea.vmem %s0, %s187
      %p189 = scmp.lt.s32.totalorder %s15, 1
      %s190 = scalar_select %p189, %s15, 1
      %s191 = smul.addr %s190, 4
      %s192 = scalar_lea.vmem %s4, %s191
      %v194 = vld [vmem:[%s188] sm:$0xf]
      %v195 = vld [vmem:[%s1] sm:$0x3]
      %v196 = vld [vmem:[%s3] sm:$0xf]
      %198 = vrot.lane.b32.xlu0 %v194, 120
      %v199 = vpop.permute.xlu0 %198
      %201 = vrot.lane.b32.xlu0 %v194, 8
      %v202 = vpop.permute.xlu0 %201
      %204 = vrot.lane.b32.xlu0 %v194, 24
      %v205 = vpop.permute.xlu0 %204
      %vm207 = vcmask 64512
      %v208 = vsel %vm207, %v199, %v202
      %vm209 = vcmask 588800
      %v210 = vsel %vm209, %v208, %v205
      %v211 = vlaneseq
      %v212 = vand.u32 %v211, 127
      %vm213 = vcmp.lt.s32.totalorder %v212, 0
      %v214 = vsub.s32 0, %v212
      %v215 = vsel %vm213, %v214, %v212
      %v216 = vshrl.u32 %v215, 3
      %v217 = vand.u32 %v215, 7
      %v218 = vsub.s32 0, %v217
      %v219 = vsel %vm213, %v218, %v217
      %vm220 = vcmp.ne.s32.totalorder %v219, 0
      %vm221 = vcmp.lt.s32.totalorder %v219, 0
      %vm222 = vmand %vm221, %vm220
      %v223 = vadd.s32 %v219, 8
      %v224 = vsel %vm222, %v223, %v219
      %vm225 = vcmp.eq.s32.totalorder %v224, 0
      %vm226 = vcmp.eq.s32.totalorder %v224, 7
      %228 = vrot.lane.b32.xlu0 %v210, 1
      %v229 = vpop.permute.xlu0 %228
      %vm231 = vcmask 7168
      %v232 = vsel %vm231, %v210, %v229
      %233 = vrot.lane.b32.xlu0 %v210, 127
      %v234 = vpop.permute.xlu0 %233
      %vm236 = vcmask 515072
      %v237 = vsel %vm236, %v234, %v210
      %v238 = vsel %vm225, %v237, %v232
      %v239 = vsel %vm226, %v232, %v237
      %240 = vrot.lane.b32.xlu0 %v210, 120
      %v241 = vpop.permute.xlu0 %240
      %243 = vrot.lane.b32.xlu0 %v210, 121
      %v244 = vpop.permute.xlu0 %243
      %v246 = vsel %vm231, %v241, %v244
      %247 = vrot.lane.b32.xlu0 %v210, 119
      %v248 = vpop.permute.xlu0 %247
      %v250 = vsel %vm236, %v248, %v241
      %v251 = vsel %vm225, %v250, %v246
      %v252 = vsel %vm226, %v246, %v250
      %253 = vrot.lane.b32.xlu0 %v210, 112
      %v254 = vpop.permute.xlu0 %253
      %256 = vrot.lane.b32.xlu0 %v210, 113
      %v257 = vpop.permute.xlu0 %256
      %v259 = vsel %vm231, %v254, %v257
      %260 = vrot.lane.b32.xlu0 %v210, 111
      %v261 = vpop.permute.xlu0 %260
      %v263 = vsel %vm236, %v261, %v254
      %v264 = vsel %vm225, %v263, %v259
      %v265 = vsel %vm226, %v259, %v263
      %v266 = vrot.slane %v210, 4
      %v269 = vrot.slane %v251, 4
      %v272 = vrot.slane %v252, 4
      %274 = vrot.lane.b32.xlu0 %v266, 112
      %v275 = vpop.permute.xlu0 %274
      %vm277 = vcmask 1043456
      %v278 = vsel %vm277, %v238, %v266
      %v279 = vsel %vm277, %v239, %v269
      %v280 = vsel %vm277, %v241, %v272
      %v281 = vsel %vm277, %v264, %v275
      %v282 = vpack.c.bf16 %v279, %v278
      %v283 = vpack.c.bf16 %v281, %v280
      %v284 = vpack.c.bf16 %v265, %v265
      %286 = vset.pattern.permute.xlu0 0
      %287 = vperm.xlu0 %286, %v196
      %v288 = vpop.permute.xlu0 %287
      %vm290 = vcmask 293888
      %v292 = vsel %vm290, %v195, 0
      %vm294 = vcmask 1041408
      %v296 = vsel %vm294, %v284, 0
      %298 = vmatprep.subr.bf16.mxu0 0
      %299 = vmatpush1.bf16.msra.mxu0 0
      %300 = vmatprep.subr.bf16.mxu0 0
      %301 = vmatpush1.bf16.msra.mxu0 0
      %302 = vmatprep.subr.bf16.mxu0 0
      %303 = vmatpush1.bf16.msra.mxu0 0
      %304 = vmatprep.subr.bf16.mxu0 0
      %305 = vmatpush1.bf16.msra.mxu0 0
      %306 = vmatprep.subr.bf16.mxu0 0
      %307 = vmatpush1.bf16.msra.mxu0 0
      %308 = vmatprep.subr.bf16.mxu0 0
      %309 = vmatpush1.bf16.msra.mxu0 %v296
      %310 = vmatprep.subr.bf16.mxu0 0
      %311 = vmatpush1.bf16.msra.mxu0 %v283
      %312 = vmatprep.subr.bf16.mxu0 0
      %313 = vmatpush1.bf16.msra.mxu0 %v282
      %314 = vmatprep.subr.bf16.mxu0 0
      %315 = vmatpush2.bf16.msra.mxu0 0
      %316 = vmatprep.subr.bf16.mxu0 0
      %317 = vmatpush2.bf16.msra.mxu0 0
      %318 = vmatprep.subr.bf16.mxu0 0
      %319 = vmatpush2.bf16.msra.mxu0 0
      %320 = vmatprep.subr.bf16.mxu0 0
      %321 = vmatpush2.bf16.msra.mxu0 0
      %322 = vmatprep.subr.bf16.mxu0 0
      %323 = vmatpush2.bf16.msra.mxu0 0
      %324 = vmatprep.subr.bf16.mxu0 0
      %325 = vmatpush2.bf16.msra.mxu0 0
      %326 = vmatprep.subr.bf16.mxu0 0
      %327 = vmatpush2.bf16.msra.mxu0 0
      %328 = vmatprep.subr.bf16.mxu0 0
      %329 = vmatpush2.bf16.msra.mxu0 0
      %330 = vmatprep.mubr.bf16.mxu0 0
      %331 = vmatmul.mubr.bf16.gmra.mxu0 %v292
      %v332 = vpop.f32.mrf.mxu0
      %v333 = vadd.f32 %v288, %v332
      %v334 = vpop.f32.mrf.mxu0
      %v335 = vpop.f32.mrf.mxu0
      %v336 = vpop.f32.mrf.mxu0
      %337 = vdwg.mxu0
      %s338 = scalar_lea.vmem %s3, 4
      %v339 = vld [vmem:[%s338] sm:$0xf]
      %s340 = scalar_lea.vmem %s3, 8
      %v341 = vld [vmem:[%s340] sm:$0xf]
      %vm342 = vcmask 519168
      %v343 = vsel %vm342, %v333, 0.0
      %344 = vadd.xlane.f32.xlu0 %v343
      %v345 = vpop.xlane.xlu0 %344
      %v346 = vrot.slane %v345, 4
      %v347 = vadd.f32 %v345, %v346
      %v348 = vrot.slane %v347, 2
      %v349 = vadd.f32 %v347, %v348
      %v350 = vrot.slane %v349, 1
      %v351 = vadd.f32 %v349, %v350
      %s352 = vtos %v351
      %s353 = smul.f32 %s352, 0.00390625
      %v354 = vmul.f32 %v333, %v333
      %v355 = vsel %vm342, %v354, 0.0
      %356 = vadd.xlane.f32.xlu0 %v355
      %v357 = vpop.xlane.xlu0 %356
      %v358 = vrot.slane %v357, 4
      %v359 = vadd.f32 %v357, %v358
      %v360 = vrot.slane %v359, 2
      %v361 = vadd.f32 %v359, %v360
      %v362 = vrot.slane %v361, 1
      %v363 = vadd.f32 %v361, %v362
      %s364 = vtos %v363
      %s365 = smul.f32 %s364, 0.00390625
      %s366 = smul.f32 %s353, %s353
      %s367 = ssub.f32 %s365, %s366
      %s368 = sadd.f32 %s367, 1e-05
      %v369 = vstv %s368
      %v370 = vrsqrt.pop %v369
      %s371 = vtos %v370
      %v372 = vstv %s353
      %v373 = vsub.f32 %v333, %v372
      %v374 = vstv %s371
      %v375 = vmul.f32 %v373, %v374
      %377 = vset.pattern.permute.xlu0 0
      %378 = vperm.xlu0 %377, %v339
      %v379 = vpop.permute.xlu0 %378
      %v381 = vmul.f32 %v375, %v379
      %383 = vset.pattern.permute.xlu0 0
      %384 = vperm.xlu0 %383, %v341
      %v385 = vpop.permute.xlu0 %384
      %v387 = vadd.f32 %v381, %v385
      %v388 = vmul.f32 %v387, 0.5
      %v389 = vmul.f32 %v387, 0.70710677
      %v390 = verf.f32.pop %v389
      %v391 = vadd.f32 %v390, 1.0
      %v392 = vmul.f32 %v388, %v391
      %v393 = vld [vmem:[%s2] sm:$0x3]
      %s394 = scalar_lea.vmem %s3, 12
      %v395 = vld [vmem:[%s394] sm:$0xf]
      %397 = vrot.lane.b32.xlu0 %v392, 120
      %v398 = vpop.permute.xlu0 %397
      %400 = vrot.lane.b32.xlu0 %v392, 8
      %v401 = vpop.permute.xlu0 %400
      %403 = vrot.lane.b32.xlu0 %v392, 24
      %v404 = vpop.permute.xlu0 %403
      %v406 = vsel %vm207, %v398, %v401
      %v407 = vsel %vm209, %v406, %v404
      %409 = vrot.lane.b32.xlu0 %v407, 1
      %v410 = vpop.permute.xlu0 %409
      %v412 = vsel %vm231, %v407, %v410
      %413 = vrot.lane.b32.xlu0 %v407, 127
      %v414 = vpop.permute.xlu0 %413
      %v416 = vsel %vm236, %v414, %v407
      %v417 = vsel %vm225, %v416, %v412
      %v418 = vsel %vm226, %v412, %v416
      %419 = vrot.lane.b32.xlu0 %v407, 120
      %v420 = vpop.permute.xlu0 %419
      %422 = vrot.lane.b32.xlu0 %v407, 121
      %v423 = vpop.permute.xlu0 %422
      %v425 = vsel %vm231, %v420, %v423
      %426 = vrot.lane.b32.xlu0 %v407, 119
      %v427 = vpop.permute.xlu0 %426
      %v429 = vsel %vm236, %v427, %v420
      %v430 = vsel %vm225, %v429, %v425
      %v431 = vsel %vm226, %v425, %v429
      %432 = vrot.lane.b32.xlu0 %v407, 112
      %v433 = vpop.permute.xlu0 %432
      %435 = vrot.lane.b32.xlu0 %v407, 113
      %v436 = vpop.permute.xlu0 %435
      %v438 = vsel %vm231, %v433, %v436
      %439 = vrot.lane.b32.xlu0 %v407, 111
      %v440 = vpop.permute.xlu0 %439
      %v442 = vsel %vm236, %v440, %v433
      %v443 = vsel %vm225, %v442, %v438
      %v444 = vsel %vm226, %v438, %v442
      %v445 = vrot.slane %v407, 4
      %v448 = vrot.slane %v430, 4
      %v451 = vrot.slane %v431, 4
      %453 = vrot.lane.b32.xlu0 %v445, 112
      %v454 = vpop.permute.xlu0 %453
      %v456 = vsel %vm277, %v417, %v445
      %v457 = vsel %vm277, %v418, %v448
      %v458 = vsel %vm277, %v420, %v451
      %v459 = vsel %vm277, %v443, %v454
      %v460 = vpack.c.bf16 %v457, %v456
      %v461 = vpack.c.bf16 %v459, %v458
      %v462 = vpack.c.bf16 %v444, %v444
      %464 = vset.pattern.permute.xlu0 0
      %465 = vperm.xlu0 %464, %v395
      %v466 = vpop.permute.xlu0 %465
      %v469 = vsel %vm290, %v393, 0
      %v472 = vsel %vm294, %v462, 0
      %474 = vmatprep.subr.bf16.mxu0 0
      %475 = vmatpush1.bf16.msra.mxu0 0
      %476 = vmatprep.subr.bf16.mxu0 0
      %477 = vmatpush1.bf16.msra.mxu0 0
      %478 = vmatprep.subr.bf16.mxu0 0
      %479 = vmatpush1.bf16.msra.mxu0 0
      %480 = vmatprep.subr.bf16.mxu0 0
      %481 = vmatpush1.bf16.msra.mxu0 0
      %482 = vmatprep.subr.bf16.mxu0 0
      %483 = vmatpush1.bf16.msra.mxu0 0
      %484 = vmatprep.subr.bf16.mxu0 0
      %485 = vmatpush1.bf16.msra.mxu0 %v472
      %486 = vmatprep.subr.bf16.mxu0 0
      %487 = vmatpush1.bf16.msra.mxu0 %v461
      %488 = vmatprep.subr.bf16.mxu0 0
      %489 = vmatpush1.bf16.msra.mxu0 %v460
      %490 = vmatprep.subr.bf16.mxu0 0
      %491 = vmatpush2.bf16.msra.mxu0 0
      %492 = vmatprep.subr.bf16.mxu0 0
      %493 = vmatpush2.bf16.msra.mxu0 0
      %494 = vmatprep.subr.bf16.mxu0 0
      %495 = vmatpush2.bf16.msra.mxu0 0
      %496 = vmatprep.subr.bf16.mxu0 0
      %497 = vmatpush2.bf16.msra.mxu0 0
      %498 = vmatprep.subr.bf16.mxu0 0
      %499 = vmatpush2.bf16.msra.mxu0 0
      %500 = vmatprep.subr.bf16.mxu0 0
      %501 = vmatpush2.bf16.msra.mxu0 0
      %502 = vmatprep.subr.bf16.mxu0 0
      %503 = vmatpush2.bf16.msra.mxu0 0
      %504 = vmatprep.subr.bf16.mxu0 0
      %505 = vmatpush2.bf16.msra.mxu0 0
      %506 = vmatprep.mubr.bf16.mxu0 0
      %507 = vmatmul.mubr.bf16.gmra.mxu0 %v469
      %v508 = vpop.f32.mrf.mxu0
      %v509 = vadd.f32 %v466, %v508
      %v510 = vpop.f32.mrf.mxu0
      %v511 = vpop.f32.mrf.mxu0
      %v512 = vpop.f32.mrf.mxu0
      %513 = vdwg.mxu0
      %s514 = scalar_lea.vmem %s3, 16
      %v515 = vld [vmem:[%s514] sm:$0xf]
      %s516 = scalar_lea.vmem %s3, 20
      %v517 = vld [vmem:[%s516] sm:$0xf]
      %v518 = vsel %vm342, %v509, 0.0
      %519 = vadd.xlane.f32.xlu0 %v518
      %v520 = vpop.xlane.xlu0 %519
      %v521 = vrot.slane %v520, 4
      %v522 = vadd.f32 %v520, %v521
      %v523 = vrot.slane %v522, 2
      %v524 = vadd.f32 %v522, %v523
      %v525 = vrot.slane %v524, 1
      %v526 = vadd.f32 %v524, %v525
      %s527 = vtos %v526
      %s528 = smul.f32 %s527, 0.00390625
      %v529 = vmul.f32 %v509, %v509
      %v530 = vsel %vm342, %v529, 0.0
      %531 = vadd.xlane.f32.xlu0 %v530
      %v532 = vpop.xlane.xlu0 %531
      %v533 = vrot.slane %v532, 4
      %v534 = vadd.f32 %v532, %v533
      %v535 = vrot.slane %v534, 2
      %v536 = vadd.f32 %v534, %v535
      %v537 = vrot.slane %v536, 1
      %v538 = vadd.f32 %v536, %v537
      %s539 = vtos %v538
      %s540 = smul.f32 %s539, 0.00390625
      %s541 = smul.f32 %s528, %s528
      %s542 = ssub.f32 %s540, %s541
      %s543 = sadd.f32 %s542, 1e-05
      %v544 = vstv %s543
      %v545 = vrsqrt.pop %v544
      %s546 = vtos %v545
      %v547 = vstv %s528
      %v548 = vsub.f32 %v509, %v547
      %v549 = vstv %s546
      %v550 = vmul.f32 %v548, %v549
      %552 = vset.pattern.permute.xlu0 0
      %553 = vperm.xlu0 %552, %v515
      %v554 = vpop.permute.xlu0 %553
      %v556 = vmul.f32 %v550, %v554
      %558 = vset.pattern.permute.xlu0 0
      %559 = vperm.xlu0 %558, %v517
      %v560 = vpop.permute.xlu0 %559
      %v562 = vadd.f32 %v556, %v560
      %v563 = vadd.f32 %v562, %v194
      %v564 = vmul.f32 %v563, 0.5
      %v565 = vmul.f32 %v563, 0.70710677
      %v566 = verf.f32.pop %v565
      %v567 = vadd.f32 %v566, 1.0
      %v568 = vmul.f32 %v564, %v567
      %569 = vst.msk [vmem:[%s192] sm:$0xf] %vm342, %v568
      %p570 = scmp.lt.s32.totalorder %s15, 1
      %s571 = scalar_select %p570, %s15, 1
      %s572 = smul.addr %s571, 4
      %s573 = scalar_lea.vmem %s4, %s572
      // Predicated region
      $region37: #{downsample_pallas.3} parent=35 // pred_check
        %p574 = pneg %p122
      $region38: #{downsample_pallas.3} parent=35 // pred_check_branch
        %576 = sbr.rel (%p574) target = $region40
      $region39: #{downsample_pallas.3} parent=35 // pred_region
        _
      $region40: #{downsample_pallas.3} parent=35 // pred_fallthru
        _
    $region36: #{downsample_pallas.3} parent=5 // pred_fallthru
      _
    %p577 = scmp.le.s32.totalorder 2, %s10
    // Predicated region
    $region41: #{downsample_pallas.3} parent=5 // pred_check
      %p578 = pneg %p577
    $region42: #{downsample_pallas.3} parent=5 // pred_check_branch
      %580 = sbr.rel (%p578) target = $region44
    $region43: #{downsample_pallas.3} parent=5 // pred_region
      %s581 = ssub.s32 %s10, 2
      // Predicated region
      $region45: #{downsample_pallas.3} parent=43 // pred_check
        %p582 = pneg %p128
      $region46: #{downsample_pallas.3} parent=43 // pred_check_branch
        %584 = sbr.rel (%p582) target = $region48
      $region47: #{downsample_pallas.3} parent=43 // pred_region
        %p585 = scmp.lt.s32.totalorder %s16, 1
        %s586 = scalar_select %p585, %s16, 1
        %s587 = smul.addr %s586, 4
        %s588 = scalar_lea.vmem %s4, %s587
      $region48: #{downsample_pallas.3} parent=43 // pred_fallthru
        _
    $region44: #{downsample_pallas.3} parent=5 // pred_fallthru
      _
  $region6: #{downsample_pallas.3} parent=0 // loop_footer
    %s14 = sadd.s32 1, %s10
  $region7: #{downsample_pallas.3} parent=0 // loop_footer_branch
    %9 = sbr.rel target = $region3
  $region8: #{downsample_pallas.3} parent=0 // loop_exit
    _

// kernel: downsample_pallas.5
$region0: #{downsample_pallas.5}
  #allocation0 [shape = 'u32[]', space=smem, size = 0x4, offset = 0x4, fixed_abs, tag = 'smem constant byte address 0x4 - core index']
  #allocation1 [shape = 'u32[144,128]{1,0:T(1,128)}', space=vmem, size = 0x12000, scoped, tag = 'internal scratch']
  %s0 = inlined_call_operand.vmem [shape: f32[2,4,64], index: 0, kind: input, shape index: {}]
  %s1 = inlined_call_operand.vmem [shape: bf16[8,36], index: 1, kind: input, shape index: {}]
  %s2 = inlined_call_operand.vmem [shape: bf16[8,72], index: 2, kind: input, shape index: {}]
  %s3 = inlined_call_operand.vmem [shape: f32[6,8,1], index: 3, kind: input, shape index: {}]
  %s4 = inlined_call_operand.vmem [shape: f32[2,8,1], index: 4, kind: input, shape index: {}]
  %s5 = inlined_call_operand.vmem [shape: f32[2,8,64], index: 5, kind: output, shape index: {}]
  %s6 = sld [smem:[#allocation0]]
  $region53: #{downsample_pallas.5} parent=0
    _
  %s8 = ssub.s32 1, %s6
  %s9 = scalar_select 0, %s8, %s6
  loop: start=0, step=1, limit=4
  $region2: #{downsample_pallas.5} parent=0 // loop_pre_header
    _
  $region3: #{downsample_pallas.5} parent=0 // loop_header
    %s11 = sphi 0, %s15
    %p12 = scmp.ge.s32.totalorder %s11, 4
    %s21 = sphi 0, %s23
    %s24 = sphi 0, %s21
    %s25 = sphi 0, %s24
    %s41 = sphi 0, %s25
    %s45 = sphi 0, %s45
    %s47 = sphi 0, %s45
    %s48 = sphi 0, %s47
    %s62 = sphi 0, %s48
    %s66 = sphi 0, %s66
    %s68 = sphi 0, %s66
    %s69 = sphi 0, %s68
    %s83 = sphi 0, %s69
    %s87 = sphi 0, %s87
    %s89 = sphi 0, %s87
    %s90 = sphi 0, %s89
    %s104 = sphi 0, %s90
    %s110 = sphi 0, %s112
    %s113 = sphi 0, %s110
    %s114 = sphi 0, %s113
    %s130 = sphi 0, %s114
    %s136 = sphi 0, %s138
    %s139 = sphi 0, %s136
    %s140 = sphi 0, %s139
    %s156 = sphi 0, %s140
  $region4: #{downsample_pallas.5} parent=0 // loop_header_branch
    %14 = sbr.rel (%p12) target = $region8
  $region5: #{downsample_pallas.5} parent=0 // loop_body
    %s16 = ssub.s32 %s11, 1
    %s17 = ssub.s32 %s11, 2
    %s18 = sadd.s32 %s11, 1
    %s19 = ssub.s32 %s11, %s18
    %p20 = scmp.eq.s32.totalorder %s19, 0
    %s22 = sadd.s32 %s21, 1
    %s23 = scalar_select %p20, %s21, %s22
    %p26 = pneg %p20
    %p27 = scmp.eq.s32.totalorder %s11, 1
    %p28 = por %p26, %p27
    %p29 = scmp.ne.s32.totalorder %s21, %s24
    %p30 = scmp.eq.s32.totalorder %s11, 0
    %p31 = por %p29, %p30
    %p32 = scmp.ne.s32.totalorder %s21, %s24
    %p33 = scmp.eq.s32.totalorder %s16, 1
    %p34 = por %p32, %p33
    %p35 = scmp.ne.s32.totalorder %s24, %s25
    %p36 = scmp.eq.s32.totalorder %s16, 0
    %p37 = por %p35, %p36
    %p38 = scmp.ne.s32.totalorder %s24, %s25
    %p39 = scmp.eq.s32.totalorder %s17, 1
    %p40 = por %p38, %p39
    %p42 = scmp.ne.s32.totalorder %s25, %s41
    %p43 = scmp.eq.s32.totalorder %s17, 0
    %p44 = por %p42, %p43
    %s46 = sadd.s32 %s45, 1
    %p49 = scmp.eq.s32.totalorder %s11, 1
    %p50 = scmp.ne.s32.totalorder %s45, %s47
    %p51 = scmp.eq.s32.totalorder %s11, 0
    %p52 = por %p50, %p51
    %p53 = scmp.ne.s32.totalorder %s45, %s47
    %p54 = scmp.eq.s32.totalorder %s16, 1
    %p55 = por %p53, %p54
    %p56 = scmp.ne.s32.totalorder %s47, %s48
    %p57 = scmp.eq.s32.totalorder %s16, 0
    %p58 = por %p56, %p57
    %p59 = scmp.ne.s32.totalorder %s47, %s48
    %p60 = scmp.eq.s32.totalorder %s17, 1
    %p61 = por %p59, %p60
    %p63 = scmp.ne.s32.totalorder %s48, %s62
    %p64 = scmp.eq.s32.totalorder %s17, 0
    %p65 = por %p63, %p64
    %s67 = sadd.s32 %s66, 1
    %p70 = scmp.eq.s32.totalorder %s11, 1
    %p71 = scmp.ne.s32.totalorder %s66, %s68
    %p72 = scmp.eq.s32.totalorder %s11, 0
    %p73 = por %p71, %p72
    %p74 = scmp.ne.s32.totalorder %s66, %s68
    %p75 = scmp.eq.s32.totalorder %s16, 1
    %p76 = por %p74, %p75
    %p77 = scmp.ne.s32.totalorder %s68, %s69
    %p78 = scmp.eq.s32.totalorder %s16, 0
    %p79 = por %p77, %p78
    %p80 = scmp.ne.s32.totalorder %s68, %s69
    %p81 = scmp.eq.s32.totalorder %s17, 1
    %p82 = por %p80, %p81
    %p84 = scmp.ne.s32.totalorder %s69, %s83
    %p85 = scmp.eq.s32.totalorder %s17, 0
    %p86 = por %p84, %p85
    %s88 = sadd.s32 %s87, 1
    %p91 = scmp.eq.s32.totalorder %s11, 1
    %p92 = scmp.ne.s32.totalorder %s87, %s89
    %p93 = scmp.eq.s32.totalorder %s11, 0
    %p94 = por %p92, %p93
    %p95 = scmp.ne.s32.totalorder %s87, %s89
    %p96 = scmp.eq.s32.totalorder %s16, 1
    %p97 = por %p95, %p96
    %p98 = scmp.ne.s32.totalorder %s89, %s90
    %p99 = scmp.eq.s32.totalorder %s16, 0
    %p100 = por %p98, %p99
    %p101 = scmp.ne.s32.totalorder %s89, %s90
    %p102 = scmp.eq.s32.totalorder %s17, 1
    %p103 = por %p101, %p102
    %p105 = scmp.ne.s32.totalorder %s90, %s104
    %p106 = scmp.eq.s32.totalorder %s17, 0
    %p107 = por %p105, %p106
    %s108 = ssub.s32 %s11, %s18
    %p109 = scmp.eq.s32.totalorder %s108, 0
    %s111 = sadd.s32 %s110, 1
    %s112 = scalar_select %p109, %s110, %s111
    %p115 = pneg %p109
    %p116 = scmp.eq.s32.totalorder %s11, 1
    %p117 = por %p115, %p116
    %p118 = scmp.ne.s32.totalorder %s110, %s113
    %p119 = scmp.eq.s32.totalorder %s11, 0
    %p120 = por %p118, %p119
    %p121 = scmp.ne.s32.totalorder %s110, %s113
    %p122 = scmp.eq.s32.totalorder %s16, 1
    %p123 = por %p121, %p122
    %p124 = scmp.ne.s32.totalorder %s113, %s114
    %p125 = scmp.eq.s32.totalorder %s16, 0
    %p126 = por %p124, %p125
    %p127 = scmp.ne.s32.totalorder %s113, %s114
    %p128 = scmp.eq.s32.totalorder %s17, 1
    %p129 = por %p127, %p128
    %p131 = scmp.ne.s32.totalorder %s114, %s130
    %p132 = scmp.eq.s32.totalorder %s17, 0
    %p133 = por %p131, %p132
    %s134 = ssub.s32 %s11, %s18
    %p135 = scmp.eq.s32.totalorder %s134, 0
    %s137 = sadd.s32 %s136, 1
    %s138 = scalar_select %p135, %s136, %s137
    %p141 = pneg %p135
    %p142 = scmp.eq.s32.totalorder %s11, 1
    %p143 = por %p141, %p142
    %p144 = scmp.ne.s32.totalorder %s136, %s139
    %p145 = scmp.eq.s32.totalorder %s11, 0
    %p146 = por %p144, %p145
    %p147 = scmp.ne.s32.totalorder %s136, %s139
    %p148 = scmp.eq.s32.totalorder %s16, 1
    %p149 = por %p147, %p148
    %p150 = scmp.ne.s32.totalorder %s139, %s140
    %p151 = scmp.eq.s32.totalorder %s16, 0
    %p152 = por %p150, %p151
    %p153 = scmp.ne.s32.totalorder %s139, %s140
    %p154 = scmp.eq.s32.totalorder %s17, 1
    %p155 = por %p153, %p154
    %p157 = scmp.ne.s32.totalorder %s140, %s156
    %p158 = scmp.eq.s32.totalorder %s17, 0
    %p159 = por %p157, %p158
    %p160 = scmp.le.s32.totalorder 1, %s11
    %p161 = scmp.lt.s32.totalorder %s11, 3
    %p162 = pnand %p160, %p161
    %p163 = pneg %p162
    // Predicated region
    $region9: #{downsample_pallas.5} parent=5 // pred_check
      _
    $region10: #{downsample_pallas.5} parent=5 // pred_check_branch
      %165 = sbr.rel (%p162) target = $region12
    $region11: #{downsample_pallas.5} parent=5 // pred_region
      %s166 = ssub.s32 %s11, 1
      // Predicated region
      $region13: #{downsample_pallas.5} parent=11 // pred_check
        %p167 = pneg %p58
      $region14: #{downsample_pallas.5} parent=11 // pred_check_branch
        %169 = sbr.rel (%p167) target = $region16
      $region15: #{downsample_pallas.5} parent=11 // pred_region
        _
      $region16: #{downsample_pallas.5} parent=11 // pred_fallthru
        _
      // Predicated region
      $region17: #{downsample_pallas.5} parent=11 // pred_check
        %p170 = pneg %p79
      $region18: #{downsample_pallas.5} parent=11 // pred_check_branch
        %172 = sbr.rel (%p170) target = $region20
      $region19: #{downsample_pallas.5} parent=11 // pred_region
        _
      $region20: #{downsample_pallas.5} parent=11 // pred_fallthru
        _
      // Predicated region
      $region21: #{downsample_pallas.5} parent=11 // pred_check
        %p173 = pneg %p100
      $region22: #{downsample_pallas.5} parent=11 // pred_check_branch
        %175 = sbr.rel (%p173) target = $region24
      $region23: #{downsample_pallas.5} parent=11 // pred_region
        _
      $region24: #{downsample_pallas.5} parent=11 // pred_fallthru
        _
    $region12: #{downsample_pallas.5} parent=5 // pred_fallthru
      _
    %p176 = scmp.lt.s32.totalorder %s11, 2
    // Predicated region
    $region25: #{downsample_pallas.5} parent=5 // pred_check
      %p177 = pneg %p176
    $region26: #{downsample_pallas.5} parent=5 // pred_check_branch
      %179 = sbr.rel (%p177) target = $region28
    $region27: #{downsample_pallas.5} parent=5 // pred_region
      // Predicated region
      $region29: #{downsample_pallas.5} parent=27 // pred_check
        %p180 = pneg %p31
      $region30: #{downsample_pallas.5} parent=27 // pred_check_branch
        %182 = sbr.rel (%p180) target = $region32
      $region31: #{downsample_pallas.5} parent=27 // pred_region
        %p183 = scmp.lt.s32.totalorder %s11, 1
        %s184 = scalar_select %p183, %s11, 1
        %s185 = smul.addr %s184, 4
        %s186 = scalar_lea.vmem %s0, %s185
      $region32: #{downsample_pallas.5} parent=27 // pred_fallthru
        _
      // Predicated region
      $region33: #{downsample_pallas.5} parent=27 // pred_check
        %p187 = pneg %p120
      $region34: #{downsample_pallas.5} parent=27 // pred_check_branch
        %189 = sbr.rel (%p187) target = $region36
      $region35: #{downsample_pallas.5} parent=27 // pred_region
        %p190 = scmp.lt.s32.totalorder %s11, 1
        %s191 = scalar_select %p190, %s11, 1
        %s192 = smul.addr %s191, 8
        %s193 = scalar_lea.vmem %s4, %s192
      $region36: #{downsample_pallas.5} parent=27 // pred_fallthru
        _
    $region28: #{downsample_pallas.5} parent=5 // pred_fallthru
      _
    %p194 = scmp.le.s32.totalorder 1, %s11
    %p195 = scmp.lt.s32.totalorder %s11, 3
    %p196 = pnand %p194, %p195
    %p197 = pneg %p196
    // Predicated region
    $region37: #{downsample_pallas.5} parent=5 // pred_check
      _
    $region38: #{downsample_pallas.5} parent=5 // pred_check_branch
      %199 = sbr.rel (%p196) target = $region40
    $region39: #{downsample_pallas.5} parent=5 // pred_region
      %s200 = ssub.s32 %s11, 1
      %p201 = scmp.lt.s32.totalorder %s16, 1
      %s202 = scalar_select %p201, %s16, 1
      %s203 = smul.addr %s202, 4
      %s204 = scalar_lea.vmem %s0, %s203
      %p205 = pneg %p37
      %p206 = pneg %p34
      %p207 = pneg %p58
      %p208 = pneg %p55
      %p209 = pneg %p79
      %p210 = pneg %p76
      %p211 = pneg %p100
      %p212 = pneg %p97
      %p213 = scmp.lt.s32.totalorder %s16, 1
      %s214 = scalar_select %p213, %s16, 1
      %s215 = smul.addr %s214, 8
      %s216 = scalar_lea.vmem %s4, %s215
      %p217 = pneg %p126
      %p218 = pneg %p123
      %p219 = pneg %p152
      %p220 = pneg %p149
      %p221 = scmp.lt.s32.totalorder %s16, 1
      %s222 = scalar_select %p221, %s16, 1
      %s223 = smul.addr %s222, 8
      %s224 = scalar_lea.vmem %s5, %s223
      %p225 = scmp.lt.s32.totalorder %s16, 1
      %s226 = scalar_select %p225, %s16, 1
      %s227 = smul.addr %s226, 4
      %s228 = scalar_lea.vmem %s0, %s227
      %p229 = scmp.lt.s32.totalorder %s16, 1
      %s230 = scalar_select %p229, %s16, 1
      %s231 = smul.addr %s230, 8
      %s232 = scalar_lea.vmem %s4, %s231
      %p233 = scmp.lt.s32.totalorder %s16, 1
      %s234 = scalar_select %p233, %s16, 1
      %s235 = smul.addr %s234, 8
      %s236 = scalar_lea.vmem %s5, %s235
      %v238 = vld [vmem:[%s228] sm:$0xf]
      %v239 = vld [vmem:[%s1] sm:$0xf]
      %v240 = vld [vmem:[%s3] sm:$0xff]
      %242 = vrot.lane.b32.xlu0 %v238, 120
      %v243 = vpop.permute.xlu0 %242
      %245 = vrot.lane.b32.xlu0 %v238, 8
      %v246 = vpop.permute.xlu0 %245
      %248 = vrot.lane.b32.xlu0 %v238, 24
      %v249 = vpop.permute.xlu0 %248
      %vm251 = vcmask 64512
      %v252 = vsel %vm251, %v243, %v246
      %vm253 = vcmask 588800
      %v254 = vsel %vm253, %v252, %v249
      %v255 = vlaneseq
      %v256 = vand.u32 %v255, 127
      %vm257 = vcmp.lt.s32.totalorder %v256, 0
      %v258 = vsub.s32 0, %v256
      %v259 = vsel %vm257, %v258, %v256
      %v260 = vshrl.u32 %v259, 3
      %v261 = vand.u32 %v259, 7
      %v262 = vsub.s32 0, %v261
      %v263 = vsel %vm257, %v262, %v261
      %vm264 = vcmp.ne.s32.totalorder %v263, 0
      %vm265 = vcmp.lt.s32.totalorder %v263, 0
      %vm266 = vmand %vm265, %vm264
      %v267 = vadd.s32 %v263, 8
      %v268 = vsel %vm266, %v267, %v263
      %vm269 = vcmp.eq.s32.totalorder %v268, 0
      %vm270 = vcmp.eq.s32.totalorder %v268, 7
      %272 = vrot.lane.b32.xlu0 %v254, 1
      %v273 = vpop.permute.xlu0 %272
      %vm275 = vcmask 7168
      %v276 = vsel %vm275, %v254, %v273
      %277 = vrot.lane.b32.xlu0 %v254, 127
      %v278 = vpop.permute.xlu0 %277
      %vm280 = vcmask 515072
      %v281 = vsel %vm280, %v278, %v254
      %v282 = vsel %vm269, %v281, %v276
      %v283 = vsel %vm270, %v276, %v281
      %284 = vrot.lane.b32.xlu0 %v254, 120
      %v285 = vpop.permute.xlu0 %284
      %287 = vrot.lane.b32.xlu0 %v254, 121
      %v288 = vpop.permute.xlu0 %287
      %v290 = vsel %vm275, %v285, %v288
      %291 = vrot.lane.b32.xlu0 %v254, 119
      %v292 = vpop.permute.xlu0 %291
      %v294 = vsel %vm280, %v292, %v285
      %v295 = vsel %vm269, %v294, %v290
      %v296 = vsel %vm270, %v290, %v294
      %297 = vrot.lane.b32.xlu0 %v254, 112
      %v298 = vpop.permute.xlu0 %297
      %300 = vrot.lane.b32.xlu0 %v254, 113
      %v301 = vpop.permute.xlu0 %300
      %v303 = vsel %vm275, %v298, %v301
      %304 = vrot.lane.b32.xlu0 %v254, 111
      %v305 = vpop.permute.xlu0 %304
      %v307 = vsel %vm280, %v305, %v298
      %v308 = vsel %vm269, %v307, %v303
      %v309 = vsel %vm270, %v303, %v307
      %v310 = vrot.slane %v254, 4
      %v313 = vrot.slane %v295, 4
      %v316 = vrot.slane %v296, 4
      %318 = vrot.lane.b32.xlu0 %v310, 112
      %v319 = vpop.permute.xlu0 %318
      %vm321 = vcmask 1043456
      %v322 = vsel %vm321, %v282, %v310
      %v323 = vsel %vm321, %v283, %v313
      %v324 = vsel %vm321, %v285, %v316
      %v325 = vsel %vm321, %v308, %v319
      %v326 = vpack.c.bf16 %v323, %v322
      %v327 = vpack.c.bf16 %v325, %v324
      %v328 = vpack.c.bf16 %v309, %v309
      %330 = vset.pattern.permute.xlu0 0
      %331 = vperm.xlu0 %330, %v240
      %v332 = vpop.permute.xlu0 %331
      %vm334 = vcmask 293888
      %v336 = vsel %vm334, %v239, 0
      %vm338 = vcmask 1041408
      %v340 = vsel %vm338, %v328, 0
      %342 = vmatprep.subr.bf16.mxu0 0
      %343 = vmatpush1.bf16.msra.mxu0 0
      %344 = vmatprep.subr.bf16.mxu0 0
      %345 = vmatpush1.bf16.msra.mxu0 0
      %346 = vmatprep.subr.bf16.mxu0 0
      %347 = vmatpush1.bf16.msra.mxu0 0
      %348 = vmatprep.subr.bf16.mxu0 0
      %349 = vmatpush1.bf16.msra.mxu0 0
      %350 = vmatprep.subr.bf16.mxu0 0
      %351 = vmatpush1.bf16.msra.mxu0 0
      %352 = vmatprep.subr.bf16.mxu0 0
      %353 = vmatpush1.bf16.msra.mxu0 %v340
      %354 = vmatprep.subr.bf16.mxu0 0
      %355 = vmatpush1.bf16.msra.mxu0 %v327
      %356 = vmatprep.subr.bf16.mxu0 0
      %357 = vmatpush1.bf16.msra.mxu0 %v326
      %358 = vmatprep.subr.bf16.mxu0 0
      %359 = vmatpush2.bf16.msra.mxu0 0
      %360 = vmatprep.subr.bf16.mxu0 0
      %361 = vmatpush2.bf16.msra.mxu0 0
      %362 = vmatprep.subr.bf16.mxu0 0
      %363 = vmatpush2.bf16.msra.mxu0 0
      %364 = vmatprep.subr.bf16.mxu0 0
      %365 = vmatpush2.bf16.msra.mxu0 0
      %366 = vmatprep.subr.bf16.mxu0 0
      %367 = vmatpush2.bf16.msra.mxu0 0
      %368 = vmatprep.subr.bf16.mxu0 0
      %369 = vmatpush2.bf16.msra.mxu0 0
      %370 = vmatprep.subr.bf16.mxu0 0
      %371 = vmatpush2.bf16.msra.mxu0 0
      %372 = vmatprep.subr.bf16.mxu0 0
      %373 = vmatpush2.bf16.msra.mxu0 0
      %374 = vmatprep.mubr.bf16.mxu0 0
      %375 = vmatmul.mubr.bf16.gmra.mxu0 %v336
      %v376 = vpop.f32.mrf.mxu0
      %v377 = vadd.f32 %v332, %v376
      %v378 = vpop.f32.mrf.mxu0
      %v379 = vpop.f32.mrf.mxu0
      %v380 = vpop.f32.mrf.mxu0
      %381 = vdwg.mxu0
      %s382 = scalar_lea.vmem %s3, 8
      %v383 = vld [vmem:[%s382] sm:$0xff]
      %s384 = scalar_lea.vmem %s3, 16
      %v385 = vld [vmem:[%s384] sm:$0xff]
      %vm386 = vcmask 523264
      %v387 = vsel %vm386, %v377, 0.0
      %388 = vadd.xlane.f32.xlu0 %v387
      %v389 = vpop.xlane.xlu0 %388
      %v390 = vrot.slane %v389, 4
      %v391 = vadd.f32 %v389, %v390
      %v392 = vrot.slane %v391, 2
      %v393 = vadd.f32 %v391, %v392
      %v394 = vrot.slane %v393, 1
      %v395 = vadd.f32 %v393, %v394
      %s396 = vtos %v395
      %s397 = smul.f32 %s396, 0.001953125
      %v398 = vmul.f32 %v377, %v377
      %v399 = vsel %vm386, %v398, 0.0
      %400 = vadd.xlane.f32.xlu0 %v399
      %v401 = vpop.xlane.xlu0 %400
      %v402 = vrot.slane %v401, 4
      %v403 = vadd.f32 %v401, %v402
      %v404 = vrot.slane %v403, 2
      %v405 = vadd.f32 %v403, %v404
      %v406 = vrot.slane %v405, 1
      %v407 = vadd.f32 %v405, %v406
      %s408 = vtos %v407
      %s409 = smul.f32 %s408, 0.001953125
      %s410 = smul.f32 %s397, %s397
      %s411 = ssub.f32 %s409, %s410
      %s412 = sadd.f32 %s411, 1e-05
      %v413 = vstv %s412
      %v414 = vrsqrt.pop %v413
      %s415 = vtos %v414
      %v416 = vstv %s397
      %v417 = vsub.f32 %v377, %v416
      %v418 = vstv %s415
      %v419 = vmul.f32 %v417, %v418
      %421 = vset.pattern.permute.xlu0 0
      %422 = vperm.xlu0 %421, %v383
      %v423 = vpop.permute.xlu0 %422
      %v425 = vmul.f32 %v419, %v423
      %427 = vset.pattern.permute.xlu0 0
      %428 = vperm.xlu0 %427, %v385
      %v429 = vpop.permute.xlu0 %428
      %v431 = vadd.f32 %v425, %v429
      %v432 = vmul.f32 %v431, 0.5
      %v433 = vmul.f32 %v431, 0.70710677
      %v434 = verf.f32.pop %v433
      %v435 = vadd.f32 %v434, 1.0
      %v436 = vmul.f32 %v432, %v435
      %v437 = vld [vmem:[%s2] sm:$0xf]
      %s438 = scalar_lea.vmem %s3, 24
      %v439 = vld [vmem:[%s438] sm:$0xff]
      %441 = vrot.lane.b32.xlu0 %v436, 120
      %v442 = vpop.permute.xlu0 %441
      %444 = vrot.lane.b32.xlu0 %v436, 8
      %v445 = vpop.permute.xlu0 %444
      %447 = vrot.lane.b32.xlu0 %v436, 24
      %v448 = vpop.permute.xlu0 %447
      %v450 = vsel %vm251, %v442, %v445
      %v451 = vsel %vm253, %v450, %v448
      %453 = vrot.lane.b32.xlu0 %v451, 1
      %v454 = vpop.permute.xlu0 %453
      %v456 = vsel %vm275, %v451, %v454
      %457 = vrot.lane.b32.xlu0 %v451, 127
      %v458 = vpop.permute.xlu0 %457
      %v460 = vsel %vm280, %v458, %v451
      %v461 = vsel %vm269, %v460, %v456
      %v462 = vsel %vm270, %v456, %v460
      %463 = vrot.lane.b32.xlu0 %v451, 120
      %v464 = vpop.permute.xlu0 %463
      %466 = vrot.lane.b32.xlu0 %v451, 121
      %v467 = vpop.permute.xlu0 %466
      %v469 = vsel %vm275, %v464, %v467
      %470 = vrot.lane.b32.xlu0 %v451, 119
      %v471 = vpop.permute.xlu0 %470
      %v473 = vsel %vm280, %v471, %v464
      %v474 = vsel %vm269, %v473, %v469
      %v475 = vsel %vm270, %v469, %v473
      %476 = vrot.lane.b32.xlu0 %v451, 112
      %v477 = vpop.permute.xlu0 %476
      %479 = vrot.lane.b32.xlu0 %v451, 113
      %v480 = vpop.permute.xlu0 %479
      %v482 = vsel %vm275, %v477, %v480
      %483 = vrot.lane.b32.xlu0 %v451, 111
      %v484 = vpop.permute.xlu0 %483
      %v486 = vsel %vm280, %v484, %v477
      %v487 = vsel %vm269, %v486, %v482
      %v488 = vsel %vm270, %v482, %v486
      %v489 = vpack.c.bf16 %v451, %v461
      %v490 = vpack.c.bf16 %v474, %v462
      %v491 = vpack.c.bf16 %v475, %v464
      %v492 = vpack.c.bf16 %v477, %v487
      %v493 = vpack.c.bf16 %v488, %v488
      %495 = vset.pattern.permute.xlu0 0
      %496 = vperm.xlu0 %495, %v439
      %v497 = vpop.permute.xlu0 %496
      %v500 = vsel %vm253, %v437, 0
      %v503 = vsel %vm321, %v493, 0
      %505 = vmatprep.subr.bf16.mxu0 0
      %506 = vmatpush1.bf16.msra.mxu0 0
      %507 = vmatprep.subr.bf16.mxu0 0
      %508 = vmatpush1.bf16.msra.mxu0 0
      %509 = vmatprep.subr.bf16.mxu0 0
      %510 = vmatpush1.bf16.msra.mxu0 0
      %511 = vmatprep.subr.bf16.mxu0 0
      %512 = vmatpush1.bf16.msra.mxu0 %v503
      %513 = vmatprep.subr.bf16.mxu0 0
      %514 = vmatpush1.bf16.msra.mxu0 %v492
      %515 = vmatprep.subr.bf16.mxu0 0
      %516 = vmatpush1.bf16.msra.mxu0 %v491
      %517 = vmatprep.subr.bf16.mxu0 0
      %518 = vmatpush1.bf16.msra.mxu0 %v490
      %519 = vmatprep.subr.bf16.mxu0 0
      %520 = vmatpush1.bf16.msra.mxu0 %v489
      %521 = vmatprep.subr.bf16.mxu0 0
      %522 = vmatpush2.bf16.msra.mxu0 0
      %523 = vmatprep.subr.bf16.mxu0 0
      %524 = vmatpush2.bf16.msra.mxu0 0
      %525 = vmatprep.subr.bf16.mxu0 0
      %526 = vmatpush2.bf16.msra.mxu0 0
      %527 = vmatprep.subr.bf16.mxu0 0
      %528 = vmatpush2.bf16.msra.mxu0 0
      %529 = vmatprep.subr.bf16.mxu0 0
      %530 = vmatpush2.bf16.msra.mxu0 0
      %531 = vmatprep.subr.bf16.mxu0 0
      %532 = vmatpush2.bf16.msra.mxu0 0
      %533 = vmatprep.subr.bf16.mxu0 0
      %534 = vmatpush2.bf16.msra.mxu0 0
      %535 = vmatprep.subr.bf16.mxu0 0
      %536 = vmatpush2.bf16.msra.mxu0 0
      %537 = vmatprep.mubr.bf16.mxu0 0
      %538 = vmatmul.mubr.bf16.gmra.mxu0 %v500
      %v539 = vpop.f32.mrf.mxu0
      %v540 = vadd.f32 %v497, %v539
      %v541 = vpop.f32.mrf.mxu0
      %v542 = vpop.f32.mrf.mxu0
      %v543 = vpop.f32.mrf.mxu0
      %544 = vdwg.mxu0
      %s545 = scalar_lea.vmem %s3, 32
      %v546 = vld [vmem:[%s545] sm:$0xff]
      %s547 = scalar_lea.vmem %s3, 40
      %v548 = vld [vmem:[%s547] sm:$0xff]
      %v549 = vsel %vm386, %v540, 0.0
      %550 = vadd.xlane.f32.xlu0 %v549
      %v551 = vpop.xlane.xlu0 %550
      %v552 = vrot.slane %v551, 4
      %v553 = vadd.f32 %v551, %v552
      %v554 = vrot.slane %v553, 2
      %v555 = vadd.f32 %v553, %v554
      %v556 = vrot.slane %v555, 1
      %v557 = vadd.f32 %v555, %v556
      %s558 = vtos %v557
      %s559 = smul.f32 %s558, 0.001953125
      %v560 = vmul.f32 %v540, %v540
      %v561 = vsel %vm386, %v560, 0.0
      %562 = vadd.xlane.f32.xlu0 %v561
      %v563 = vpop.xlane.xlu0 %562
      %v564 = vrot.slane %v563, 4
      %v565 = vadd.f32 %v563, %v564
      %v566 = vrot.slane %v565, 2
      %v567 = vadd.f32 %v565, %v566
      %v568 = vrot.slane %v567, 1
      %v569 = vadd.f32 %v567, %v568
      %s570 = vtos %v569
      %s571 = smul.f32 %s570, 0.001953125
      %s572 = smul.f32 %s559, %s559
      %s573 = ssub.f32 %s571, %s572
      %s574 = sadd.f32 %s573, 1e-05
      %v575 = vstv %s574
      %v576 = vrsqrt.pop %v575
      %s577 = vtos %v576
      %v578 = vstv %s559
      %v579 = vsub.f32 %v540, %v578
      %v580 = vstv %s577
      %v581 = vmul.f32 %v579, %v580
      %583 = vset.pattern.permute.xlu0 0
      %584 = vperm.xlu0 %583, %v546
      %v585 = vpop.permute.xlu0 %584
      %v587 = vmul.f32 %v581, %v585
      %589 = vset.pattern.permute.xlu0 0
      %590 = vperm.xlu0 %589, %v548
      %v591 = vpop.permute.xlu0 %590
      %v593 = vadd.f32 %v587, %v591
      %v594 = vmul.f32 %v593, 0.5
      %v595 = vmul.f32 %v593, 0.70710677
      %v596 = verf.f32.pop %v595
      %v597 = vadd.f32 %v596, 1.0
      %v598 = vmul.f32 %v594, %v597
      %v599 = vld [vmem:[%s232] sm:$0xff]
      %601 = vset.pattern.permute.xlu0 0
      %602 = vperm.xlu0 %601, %v599
      %v603 = vpop.permute.xlu0 %602
      %v605 = vadd.f32 %v598, %v603
      %606 = vst.msk [vmem:[%s236] sm:$0xff] %vm386, %v605
      %p607 = scmp.lt.s32.totalorder %s16, 1
      %s608 = scalar_select %p607, %s16, 1
      %s609 = smul.addr %s608, 8
      %s610 = scalar_lea.vmem %s5, %s609
      // Predicated region
      $region41: #{downsample_pallas.5} parent=39 // pred_check
        %p611 = pneg %p149
      $region42: #{downsample_pallas.5} parent=39 // pred_check_branch
        %613 = sbr.rel (%p611) target = $region44
      $region43: #{downsample_pallas.5} parent=39 // pred_region
        _
      $region44: #{downsample_pallas.5} parent=39 // pred_fallthru
        _
    $region40: #{downsample_pallas.5} parent=5 // pred_fallthru
      _
    %p614 = scmp.le.s32.totalorder 2, %s11
    // Predicated region
    $region45: #{downsample_pallas.5} parent=5 // pred_check
      %p615 = pneg %p614
    $region46: #{downsample_pallas.5} parent=5 // pred_check_branch
      %617 = sbr.rel (%p615) target = $region48
    $region47: #{downsample_pallas.5} parent=5 // pred_region
      %s618 = ssub.s32 %s11, 2
      // Predicated region
      $region49: #{downsample_pallas.5} parent=47 // pred_check
        %p619 = pneg %p155
      $region50: #{downsample_pallas.5} parent=47 // pred_check_branch
        %621 = sbr.rel (%p619) target = $region52
      $region51: #{downsample_pallas.5} parent=47 // pred_region
        %p622 = scmp.lt.s32.totalorder %s17, 1
        %s623 = scalar_select %p622, %s17, 1
        %s624 = smul.addr %s623, 8
        %s625 = scalar_lea.vmem %s5, %s624
      $region52: #{downsample_pallas.5} parent=47 // pred_fallthru
        _
    $region48: #{downsample_pallas.5} parent=5 // pred_fallthru
      _
  $region6: #{downsample_pallas.5} parent=0 // loop_footer
    %s15 = sadd.s32 1, %s11
  $region7: #{downsample_pallas.5} parent=0 // loop_footer_branch
    %10 = sbr.rel target = $region3
  $region8: #{downsample_pallas.5} parent=0 // loop_exit
    _

</llo_original>
